<compile_context>
chip_gen: v7x
topology: tpu7x:2x2x1
jax: 0.10.0
libtpu: 0.0.40
codegen_flags: <defaults>
</compile_context>

<pallas_src>
import functools

import jax
import jax.numpy as jnp
from jax import lax
from jax.experimental import pallas as pl
from jax.experimental.pallas import tpu as pltpu

_MXU_VMEM_LIMIT = 48 * 1024 * 1024    # matmul tiles (~7 MiB worst case) + headroom
_ATTN_VMEM_LIMIT = 64 * 1024 * 1024   # per-(batch, head) score slabs


def _pick_tile(dim, target, align):
    """Largest `align`-aligned divisor of `dim` not above `target` (else full dim)."""
    if dim <= target:
        return dim
    t = (target // align) * align
    while t >= align:
        if dim % t == 0:
            return t
        t -= align
    return dim


def _gelu_tanh(x):
    # TODO(synk): switch to exact-erf GELU (module uses nn.GELU()) once lax.erf
    # lowering in Mosaic is confirmed on all targets; tanh form differs <~3e-3.
    c = 0.7978845608028654  # sqrt(2/pi)
    return 0.5 * x * (1.0 + jnp.tanh(c * (x + 0.044715 * x * x * x)))


# --------------------------------------------------------------------------- #
# Tiled matmul kernels: y = activation(x @ w [+ b]); w stored (K, N).
# Operand tiles are cast to bf16 in VMEM; accumulation stays f32.
# --------------------------------------------------------------------------- #
def _matmul_kernel(x_ref, w_ref, o_ref, acc_ref, *, activation):
    @pl.when(pl.program_id(2) == 0)
    def _init():
        acc_ref[...] = jnp.zeros_like(acc_ref)

    acc_ref[...] += jnp.dot(
        x_ref[...].astype(jnp.bfloat16),
        w_ref[...].astype(jnp.bfloat16),
        preferred_element_type=jnp.float32,
    )

    @pl.when(pl.program_id(2) == pl.num_programs(2) - 1)
    def _finalize():
        val = acc_ref[...]
        if activation is not None:
            val = activation(val)
        o_ref[...] = val.astype(o_ref.dtype)


def _matmul_bias_kernel(x_ref, w_ref, b_ref, o_ref, acc_ref, *, activation):
    @pl.when(pl.program_id(2) == 0)
    def _init():
        acc_ref[...] = jnp.zeros_like(acc_ref)

    acc_ref[...] += jnp.dot(
        x_ref[...].astype(jnp.bfloat16),
        w_ref[...].astype(jnp.bfloat16),
        preferred_element_type=jnp.float32,
    )

    @pl.when(pl.program_id(2) == pl.num_programs(2) - 1)
    def _finalize():
        val = acc_ref[...] + b_ref[...].astype(jnp.float32)
        if activation is not None:
            val = activation(val)
        o_ref[...] = val.astype(o_ref.dtype)


def matmul(x, w, b=None, *, out_dtype=jnp.bfloat16, activation=None):
    m, k = x.shape
    k2, n = w.shape
    assert k == k2
    tm = _pick_tile(m, 512, 16)     # 16: bf16 sublane packing
    tn = _pick_tile(n, 512, 128)
    tk = _pick_tile(k, 1024, 128)
    grid = (m // tm, n // tn, k // tk)

    x_spec = pl.BlockSpec((tm, tk), lambda i, j, kk: (i, kk))
    w_spec = pl.BlockSpec((tk, tn), lambda i, j, kk: (kk, j))
    o_spec = pl.BlockSpec((tm, tn), lambda i, j, kk: (i, j))

    cost = pl.CostEstimate(
        flops=2 * m * n * k,
        transcendentals=(m * n if activation is not None else 0),
        bytes_accessed=(x.size * x.dtype.itemsize + w.size * w.dtype.itemsize
                        + m * n * jnp.dtype(out_dtype).itemsize),
    )
    params = pltpu.CompilerParams(
        dimension_semantics=("parallel", "parallel", "arbitrary"),
        vmem_limit_bytes=_MXU_VMEM_LIMIT,
    )

    if b is None:
        return pl.pallas_call(
            functools.partial(_matmul_kernel, activation=activation),
            out_shape=jax.ShapeDtypeStruct((m, n), out_dtype),
            grid=grid,
            in_specs=[x_spec, w_spec],
            out_specs=o_spec,
            scratch_shapes=[pltpu.VMEM((tm, tn), jnp.float32)],
            compiler_params=params,
            cost_estimate=cost,
        )(x, w)

    b2 = jnp.asarray(b, jnp.float32).reshape(1, n)
    return pl.pallas_call(
        functools.partial(_matmul_bias_kernel, activation=activation),
        out_shape=jax.ShapeDtypeStruct((m, n), out_dtype),
        grid=grid,
        in_specs=[x_spec, w_spec,
                  pl.BlockSpec((1, tn), lambda i, j, kk: (0, j))],
        out_specs=o_spec,
        scratch_shapes=[pltpu.VMEM((tm, tn), jnp.float32)],
        compiler_params=params,
        cost_estimate=cost,
    )(x, w, b2)


# --------------------------------------------------------------------------- #
# Fused relative multi-head attention: grid (B, n_head), one head per step.
# --------------------------------------------------------------------------- #
def _rel_shift_slab(bd):
    """Exact _rel_shift of one (Q, R) score slab, R == Q + 1.

      out[i, j] = bd[i, Q + j - i]      if j <= i
                = bd[i + 1, j - i - 1]  otherwise

    Realised as a per-row left-rotate by (Q - i) of concat(bd[i], bd[i+1]),
    built from log2(Q) full-array lane rotations gated by the bits of the
    per-row shift: O(Q^2 log Q) cheap VPU/XLU work, no O(Q^3) unroll.
    """
    q, r = bd.shape
    bd_next = jnp.concatenate([bd[1:, :], bd[q - 1:q, :]], axis=0)  # row i -> bd[i+1]
    cur = jnp.concatenate([bd, bd_next], axis=1)                    # (Q, 2R)
    row = lax.broadcasted_iota(jnp.int32, (q, 2 * r), 0)
    shift = q - row                                                 # in [1, Q]
    for bit in range(int(q).bit_length()):
        amt = 1 << bit
        rolled = jnp.concatenate([cur[:, amt:], cur[:, :amt]], axis=1)  # left-rotate
        cur = jnp.where((shift & amt) != 0, rolled, cur)
    return cur[:, :q]


def _attn_kernel(q_ref, k_ref, v_ref, rk_ref, o_ref, *, scale):
    # blocks (leading B / H dims squeezed): q/k/v/o -> (Q, D); rk -> (R, D).
    # q already holds rw_head_q (positional bias folded into the qkv bias).
    q = q_ref[...]
    k = k_ref[...]
    v = v_ref[...]
    rk = rk_ref[...]
    dn = (((1,), (1,)), ((), ()))  # contract head_dim directly (no k.T)
    ac = lax.dot_general(q, k, dn, preferred_element_type=jnp.float32)   # (Q, Q)
    bd = lax.dot_general(q, rk, dn, preferred_element_type=jnp.float32)  # (Q, R)
    s = (ac + _rel_shift_slab(bd)) * scale
    s = s - jnp.max(s, axis=-1, keepdims=True)
    p = jnp.exp(s)
    p = p * pl.reciprocal(jnp.sum(p, axis=-1, keepdims=True), approx=True)
    out = jnp.dot(p.astype(jnp.bfloat16), v, preferred_element_type=jnp.float32)
    o_ref[...] = out.astype(o_ref.dtype)


def attention(q, k, v, r_k, *, scale):
    """q/k/v: (B, H, Q, D) bf16 (q includes +r_head_q[-1]); r_k: (H, R, D) bf16."""
    b, h, qlen, d = q.shape
    r = r_k.shape[1]
    cost = pl.CostEstimate(
        flops=2 * b * h * qlen * d * (qlen + r) + 2 * b * h * qlen * qlen * d,
        transcendentals=b * h * qlen * qlen,
        bytes_accessed=2 * (4 * b * h * qlen * d + h * r * d),
    )
    # TODO(synk): flash-style tiling over Q / keys (online softmax) for very
    # long sequences so the (Q, Q) f32 score slab never exceeds v7x VMEM.
    qkv_spec = pl.BlockSpec((None, None, qlen, d), lambda i, j: (i, j, 0, 0))
    return pl.pallas_call(
        functools.partial(_attn_kernel, scale=scale),
        out_shape=jax.ShapeDtypeStruct((b, h, qlen, d), jnp.bfloat16),
        grid=(b, h),
        in_specs=[qkv_spec, qkv_spec, qkv_spec,
                  pl.BlockSpec((None, r, d), lambda i, j: (j, 0, 0))],
        out_specs=qkv_spec,
        compiler_params=pltpu.CompilerParams(
            dimension_semantics=("parallel", "parallel"),
            vmem_limit_bytes=_ATTN_VMEM_LIMIT,
        ),
        cost_estimate=cost,
    )(q, k, v, r_k)


# --------------------------------------------------------------------------- #
# Fused residual + LayerNorm kernels (row-tiled).
# --------------------------------------------------------------------------- #
def _ln(v, g, b, eps):
    mu = jnp.mean(v, axis=-1, keepdims=True)
    c = v - mu
    var = jnp.mean(c * c, axis=-1, keepdims=True)
    return c * lax.rsqrt(var + eps) * g + b


def _attn_double_ln_kernel(x0_ref, ao_ref, ga_ref, ba_ref, g1_ref, b1_ref,
                           o_ref, *, eps):
    # src2 = LN_attn(x0 + attn_out); x1 = LN1(x0 + src2); only x1 is written.
    x0 = x0_ref[...].astype(jnp.float32)
    src2 = _ln(x0 + ao_ref[...].astype(jnp.float32), ga_ref[...], ba_ref[...], eps)
    x1 = _ln(x0 + src2, g1_ref[...], b1_ref[...], eps)
    o_ref[...] = x1.astype(o_ref.dtype)


def _add_ln_kernel(x_ref, y_ref, g_ref, b_ref, o_ref, *, eps):
    v = x_ref[...].astype(jnp.float32) + y_ref[...].astype(jnp.float32)
    o_ref[...] = _ln(v, g_ref[...], b_ref[...], eps).astype(o_ref.dtype)


def attn_double_layernorm(x0, attn_out, ga, ba, g1, b1, *, eps=1e-5,
                          out_dtype=jnp.bfloat16):
    m, e = x0.shape
    tr = _pick_tile(m, 512, 8)
    row_spec = pl.BlockSpec((tr, e), lambda i: (i, 0))
    par_spec = pl.BlockSpec((1, e), lambda i: (0, 0))
    vec = lambda a: jnp.asarray(a, jnp.float32).reshape(1, e)
    return pl.pallas_call(
        functools.partial(_attn_double_ln_kernel, eps=eps),
        out_shape=jax.ShapeDtypeStruct((m, e), out_dtype),
        grid=(m // tr,),
        in_specs=[row_spec, row_spec, par_spec, par_spec, par_spec, par_spec],
        out_specs=row_spec,
        compiler_params=pltpu.CompilerParams(dimension_semantics=("parallel",)),
    )(x0, attn_out, vec(ga), vec(ba), vec(g1), vec(b1))


def add_layernorm(x, y, gamma, beta, *, eps=1e-5, out_dtype=jnp.float32):
    m, e = x.shape
    tr = _pick_tile(m, 512, 8)
    row_spec = pl.BlockSpec((tr, e), lambda i: (i, 0))
    par_spec = pl.BlockSpec((1, e), lambda i: (0, 0))
    return pl.pallas_call(
        functools.partial(_add_ln_kernel, eps=eps),
        out_shape=jax.ShapeDtypeStruct((m, e), out_dtype),
        grid=(m // tr,),
        in_specs=[row_spec, row_spec, par_spec, par_spec],
        out_specs=row_spec,
        compiler_params=pltpu.CompilerParams(dimension_semantics=("parallel",)),
    )(x, y, jnp.asarray(gamma, jnp.float32).reshape(1, e),
      jnp.asarray(beta, jnp.float32).reshape(1, e))


# --------------------------------------------------------------------------- #
# Full decoder layer forward (mems=None / attn_mask=None / dropout=0 path).
# --------------------------------------------------------------------------- #
def transformer_xl_decoder_layer(src, pos_emb, params, *, n_head):
    t, b, e = src.shape
    r = pos_emb.shape[0]
    d_head = e // n_head
    assert d_head * n_head == e
    # TODO(synk): mems / attn_mask paths not implemented; rel-shift assumes
    # rlen == qlen + 1 exactly as produced by the mems=None module path.
    assert r == t + 1, "_rel_shift requires rlen == qlen + 1 when mems is None"
    scale = 1.0 / float(d_head) ** 0.5

    # layout plumbing: batch-major so every kernel sees lane-dense (rows, E) slabs
    x0 = jnp.transpose(src, (1, 0, 2)).reshape(b * t, e)               # (B*T, E) f32

    # positional projection first (tiny); its q-row becomes the qkv bias so the
    # "+ r_head_q[-1]" add is folded into the main projection for free.
    r_heads = matmul(pos_emb, params["w_qkv"], out_dtype=jnp.bfloat16)      # (R, 3E)
    r_q_bias = r_heads[r - 1, 0:e].astype(jnp.float32)                      # (E,)
    qkv_bias = jnp.concatenate([r_q_bias, jnp.zeros((2 * e,), jnp.float32)])
    w_heads = matmul(x0, params["w_qkv"], qkv_bias, out_dtype=jnp.bfloat16)  # (B*T, 3E)

    # head-major layout for the (B, H) attention grid (single XLA transpose pass)
    qkv = jnp.transpose(w_heads.reshape(b, t, 3, n_head, d_head), (2, 0, 3, 1, 4))
    r_k = jnp.transpose(r_heads[:, e:2 * e].reshape(r, n_head, d_head), (1, 0, 2))

    attn_vec = attention(qkv[0], qkv[1], qkv[2], r_k, scale=scale)     # (B, H, T, D)
    # TODO(synk): fold this head transpose into the o_net matmul (head-axis K
    # reduction) to save one HBM pass over the (B*T, E) attention output.
    attn_vec = jnp.transpose(attn_vec, (0, 2, 1, 3)).reshape(b * t, e)

    attn_out = matmul(attn_vec, params["w_o"], params["b_o"],
                      out_dtype=jnp.bfloat16)                           # (B*T, E)

    # fused:  src2 = LN_attn(x0 + attn_out);  x1 = LN1(x0 + src2)
    x1 = attn_double_layernorm(x0, attn_out,
                               params["ln_attn_g"], params["ln_attn_b"],
                               params["ln1_g"], params["ln1_b"],
                               out_dtype=jnp.bfloat16)

    # feed-forward: GELU + bias fused into linear1's finalize, bf16 intermediates
    h = matmul(x1, params["w_ff1"], params["b_ff1"],
               out_dtype=jnp.bfloat16, activation=_gelu_tanh)           # (B*T, F)
    h2 = matmul(h, params["w_ff2"], params["b_ff2"], out_dtype=jnp.bfloat16)
    out = add_layernorm(x1, h2, params["ln2_g"], params["ln2_b"],
                        out_dtype=jnp.float32)

    return jnp.transpose(out.reshape(b, t, e), (1, 0, 2))               # (T, B, E)


# --------------------------------------------------------------------------- #
# Parameters: matmul weights pre-transposed (in, out) and pre-cast to bf16.
# --------------------------------------------------------------------------- #
def init_params(key, d_model, dim_feedforward):
    e, f = d_model, dim_feedforward
    ks = jax.random.split(key, 13)

    def w_init(k, din, dout):
        return (jax.random.normal(k, (din, dout), jnp.float32)
                / (din ** 0.5)).astype(jnp.bfloat16)

    def b_init(k, dout):
        return 0.02 * jax.random.normal(k, (dout,), jnp.float32)

    def g_init(k, dout):
        return jnp.ones((dout,), jnp.float32) + 0.05 * jax.random.normal(k, (dout,))

    return {
        "w_qkv": w_init(ks[0], e, 3 * e),
        "w_o": w_init(ks[1], e, e), "b_o": b_init(ks[2], e),
        "ln_attn_g": g_init(ks[3], e), "ln_attn_b": b_init(ks[4], e),
        "ln1_g": g_init(ks[5], e), "ln1_b": b_init(ks[6], e),
        "w_ff1": w_init(ks[7], e, f), "b_ff1": b_init(ks[8], f),
        "w_ff2": w_init(ks[9], f, e), "b_ff2": b_init(ks[10], e),
        "ln2_g": g_init(ks[11], e), "ln2_b": b_init(ks[12], e),
    }


# --------------------------------------------------------------------------- #
# Pure-JAX f32 reference (mirrors the PyTorch module) for a sanity cross-check.
# --------------------------------------------------------------------------- #
def _rel_shift_ref(x):  # x: (Q, R, B, N)
    q, r, b, n = x.shape
    return x.reshape(r, q, b, n)[1:].reshape(q, r - 1, b, n)


def reference_forward(src, pos_emb, params, *, n_head, eps=1e-5):
    p = {k: jnp.asarray(v, jnp.float32) for k, v in params.items()}
    t, b, e = src.shape
    rlen = pos_emb.shape[0]
    d = e // n_head
    scale = 1.0 / float(d) ** 0.5

    def layer_norm(x, g, bb):
        mu = jnp.mean(x, axis=-1, keepdims=True)
        var = jnp.mean((x - mu) ** 2, axis=-1, keepdims=True)
        return (x - mu) / jnp.sqrt(var + eps) * g + bb

    w_heads = src @ p["w_qkv"]
    r_heads = pos_emb @ p["w_qkv"]
    w_q, w_k, w_v = jnp.split(w_heads, 3, axis=-1)
    r_q, r_kk, _ = jnp.split(r_heads, 3, axis=-1)
    w_q = w_q.reshape(t, b, n_head, d)
    w_k = w_k.reshape(t, b, n_head, d)
    w_v = w_v.reshape(t, b, n_head, d)
    r_q = r_q.reshape(rlen, n_head, d)
    r_kk = r_kk.reshape(rlen, n_head, d)

    rw_q = w_q + r_q[-1]
    ac = jnp.einsum("ibnd,jbnd->ijbn", rw_q, w_k)
    bd = _rel_shift_ref(jnp.einsum("ibnd,jnd->ijbn", rw_q, r_kk))
    score = (ac + bd) * scale
    prob = jax.nn.softmax(score, axis=1)
    vec = jnp.einsum("ijbn,jbnd->ibnd", prob, w_v).reshape(t, b, e)
    attn_out = vec @ p["w_o"] + p["b_o"]

    src2 = layer_norm(src + attn_out, p["ln_attn_g"], p["ln_attn_b"])
    x = layer_norm(src + src2, p["ln1_g"], p["ln1_b"])
    h = jax.nn.gelu(x @ p["w_ff1"] + p["b_ff1"], approximate=False)
    h2 = h @ p["w_ff2"] + p["b_ff2"]
    return layer_norm(x + h2, p["ln2_g"], p["ln2_b"])


if __name__ == "__main__":
    qlen, bsz, d_model, n_head, d_ff = 8, 2, 32, 4, 64
    rlen = qlen + 1

    key = jax.random.PRNGKey(0)
    k_src, k_pos, k_par = jax.random.split(key, 3)
    src = jax.random.normal(k_src, (qlen, bsz, d_model), jnp.float32)
    pos_emb = jax.random.normal(k_pos, (rlen, d_model), jnp.float32)
    params = init_params(k_par, d_model, d_ff)

    fwd = jax.jit(functools.partial(transformer_xl_decoder_layer, n_head=n_head))
    out = jax.block_until_ready(fwd(src, pos_emb, params))

    assert out.shape == (qlen, bsz, d_model)
    assert bool(jnp.all(jnp.isfinite(out)))

    ref = reference_forward(src, pos_emb, params, n_head=n_head)
    err = float(jnp.max(jnp.abs(out - ref)))
    assert err < 0.2, f"mismatch vs f32 reference: max abs err {err}"

    print("KERNEL_OK")
</pallas_src>

<mosaic_0001>
module attributes {stable_mosaic.version = 11 : i64} {
  func.func @_matmul_kernel(%arg0: i32, %arg1: i32, %arg2: i32, %arg3: memref<9x32xf32, #tpu.memory_space<vmem>>, %arg4: memref<32x96xbf16, #tpu.memory_space<vmem>>, %arg5: memref<9x96xbf16, #tpu.memory_space<vmem>>, %arg6: memref<9x96xf32, #tpu.memory_space<vmem>>) attributes {dimension_semantics = [#tpu.dimension_semantics<parallel>, #tpu.dimension_semantics<parallel>, #tpu.dimension_semantics<arbitrary>], iteration_bounds = array<i64: 1, 1, 1>, scalar_prefetch = 0 : i64, scratch_operands = 1 : i64, tpu.core_type = #tpu.core_type<tc>, window_params = [{transform_indices = @transform_0, window_bounds = array<i64: 9, 32>}, {transform_indices = @transform_1, window_bounds = array<i64: 32, 96>}, {transform_indices = @transform_2, window_bounds = array<i64: 9, 96>}]} {
    %c0_i32 = arith.constant 0 : i32
    %0 = arith.cmpi eq, %arg2, %c0_i32 : i32
    %1 = arith.extui %0 : i1 to i32
    %c0_i32_0 = arith.constant 0 : i32
    %2 = arith.cmpi ne, %1, %c0_i32_0 : i32
    scf.if %2 {
      %cst_10 = arith.constant 0.000000e+00 : f32
      %13 = vector.broadcast %cst_10 : f32 to vector<9x96xf32>
      %c0_11 = arith.constant 0 : index
      %c0_12 = arith.constant 0 : index
      %14 = vector.load %arg6[%c0_11, %c0_12] : memref<9x96xf32, #tpu.memory_space<vmem>>, vector<9x96xf32>
      tpu.vector_store %arg6[%c0_11, %c0_12], %13 {strides = array<i32>} : memref<9x96xf32, #tpu.memory_space<vmem>>, vector<9x96xf32>,
    } else {
    }
    %c0 = arith.constant 0 : index
    %c0_1 = arith.constant 0 : index
    %3 = vector.load %arg6[%c0, %c0_1] : memref<9x96xf32, #tpu.memory_space<vmem>>, vector<9x96xf32>
    %c0_2 = arith.constant 0 : index
    %c0_3 = arith.constant 0 : index
    %4 = vector.load %arg3[%c0_2, %c0_3] : memref<9x32xf32, #tpu.memory_space<vmem>>, vector<9x32xf32>
    %5 = arith.truncf %4 : vector<9x32xf32> to vector<9x32xbf16>
    %c0_4 = arith.constant 0 : index
    %c0_5 = arith.constant 0 : index
    %6 = vector.load %arg4[%c0_4, %c0_5] : memref<32x96xbf16, #tpu.memory_space<vmem>>, vector<32x96xbf16>
    %cst = arith.constant dense<0.000000e+00> : vector<9x96xf32>
    %7 = tpu.matmul %5, %6, %cst {dimension_numbers = #tpu.dot_dimension_numbers<[1], [0], [0], [1], [0, 0, 1, 1], [], []>} : vector<9x32xbf16>, vector<32x96xbf16>, vector<9x96xf32> -> vector<9x96xf32>
    %8 = arith.addf %3, %7 : vector<9x96xf32>
    %c0_6 = arith.constant 0 : index
    %c0_7 = arith.constant 0 : index
    %9 = vector.load %arg6[%c0_6, %c0_7] : memref<9x96xf32, #tpu.memory_space<vmem>>, vector<9x96xf32>
    tpu.vector_store %arg6[%c0_6, %c0_7], %8 {strides = array<i32>} : memref<9x96xf32, #tpu.memory_space<vmem>>, vector<9x96xf32>,
    %c0_i32_8 = arith.constant 0 : i32
    %10 = arith.cmpi eq, %arg2, %c0_i32_8 : i32
    %11 = arith.extui %10 : i1 to i32
    %c0_i32_9 = arith.constant 0 : i32
    %12 = arith.cmpi ne, %11, %c0_i32_9 : i32
    scf.if %12 {
      %c0_10 = arith.constant 0 : index
      %c0_11 = arith.constant 0 : index
      %13 = vector.load %arg6[%c0_10, %c0_11] : memref<9x96xf32, #tpu.memory_space<vmem>>, vector<9x96xf32>
      %14 = arith.truncf %13 : vector<9x96xf32> to vector<9x96xbf16>
      %c0_12 = arith.constant 0 : index
      %c0_13 = arith.constant 0 : index
      %15 = vector.load %arg5[%c0_12, %c0_13] : memref<9x96xbf16, #tpu.memory_space<vmem>>, vector<9x96xbf16>
      tpu.vector_store %arg5[%c0_12, %c0_13], %14 {strides = array<i32>} : memref<9x96xbf16, #tpu.memory_space<vmem>>, vector<9x96xbf16>,
    } else {
    }
    return
  }
  func.func @transform_0(%arg0: i32, %arg1: i32, %arg2: i32) -> (i32, i32) {
    %c0_i32 = arith.constant 0 : i32
    return %arg0, %arg2 : i32, i32
  }
  func.func @transform_1(%arg0: i32, %arg1: i32, %arg2: i32) -> (i32, i32) {
    %c0_i32 = arith.constant 0 : i32
    return %arg2, %arg1 : i32, i32
  }
  func.func @transform_2(%arg0: i32, %arg1: i32, %arg2: i32) -> (i32, i32) {
    %c0_i32 = arith.constant 0 : i32
    return %arg0, %arg1 : i32, i32
  }
}

module attributes {stable_mosaic.version = 11 : i64} {
  func.func @_matmul_bias_kernel(%arg0: i32, %arg1: i32, %arg2: i32, %arg3: memref<16x32xf32, #tpu.memory_space<vmem>>, %arg4: memref<32x96xbf16, #tpu.memory_space<vmem>>, %arg5: memref<1x96xf32, #tpu.memory_space<vmem>>, %arg6: memref<16x96xbf16, #tpu.memory_space<vmem>>, %arg7: memref<16x96xf32, #tpu.memory_space<vmem>>) attributes {dimension_semantics = [#tpu.dimension_semantics<parallel>, #tpu.dimension_semantics<parallel>, #tpu.dimension_semantics<arbitrary>], iteration_bounds = array<i64: 1, 1, 1>, scalar_prefetch = 0 : i64, scratch_operands = 1 : i64, tpu.core_type = #tpu.core_type<tc>, window_params = [{transform_indices = @transform_0, window_bounds = array<i64: 16, 32>}, {transform_indices = @transform_1, window_bounds = array<i64: 32, 96>}, {transform_indices = @transform_2, window_bounds = array<i64: 1, 96>}, {transform_indices = @transform_3, window_bounds = array<i64: 16, 96>}]} {
    %c0_i32 = arith.constant 0 : i32
    %0 = arith.cmpi eq, %arg2, %c0_i32 : i32
    %1 = arith.extui %0 : i1 to i32
    %c0_i32_0 = arith.constant 0 : i32
    %2 = arith.cmpi ne, %1, %c0_i32_0 : i32
    scf.if %2 {
      %cst_10 = arith.constant 0.000000e+00 : f32
      %13 = vector.broadcast %cst_10 : f32 to vector<16x96xf32>
      %c0_11 = arith.constant 0 : index
      %c0_12 = arith.constant 0 : index
      %14 = vector.load %arg7[%c0_11, %c0_12] : memref<16x96xf32, #tpu.memory_space<vmem>>, vector<16x96xf32>
      tpu.vector_store %arg7[%c0_11, %c0_12], %13 {strides = array<i32>} : memref<16x96xf32, #tpu.memory_space<vmem>>, vector<16x96xf32>,
    } else {
    }
    %c0 = arith.constant 0 : index
    %c0_1 = arith.constant 0 : index
    %3 = vector.load %arg7[%c0, %c0_1] : memref<16x96xf32, #tpu.memory_space<vmem>>, vector<16x96xf32>
    %c0_2 = arith.constant 0 : index
    %c0_3 = arith.constant 0 : index
    %4 = vector.load %arg3[%c0_2, %c0_3] : memref<16x32xf32, #tpu.memory_space<vmem>>, vector<16x32xf32>
    %5 = arith.truncf %4 : vector<16x32xf32> to vector<16x32xbf16>
    %c0_4 = arith.constant 0 : index
    %c0_5 = arith.constant 0 : index
    %6 = vector.load %arg4[%c0_4, %c0_5] : memref<32x96xbf16, #tpu.memory_space<vmem>>, vector<32x96xbf16>
    %cst = arith.constant dense<0.000000e+00> : vector<16x96xf32>
    %7 = tpu.matmul %5, %6, %cst {dimension_numbers = #tpu.dot_dimension_numbers<[1], [0], [0], [1], [0, 0, 1, 1], [], []>} : vector<16x32xbf16>, vector<32x96xbf16>, vector<16x96xf32> -> vector<16x96xf32>
    %8 = arith.addf %3, %7 : vector<16x96xf32>
    %c0_6 = arith.constant 0 : index
    %c0_7 = arith.constant 0 : index
    %9 = vector.load %arg7[%c0_6, %c0_7] : memref<16x96xf32, #tpu.memory_space<vmem>>, vector<16x96xf32>
    tpu.vector_store %arg7[%c0_6, %c0_7], %8 {strides = array<i32>} : memref<16x96xf32, #tpu.memory_space<vmem>>, vector<16x96xf32>,
    %c0_i32_8 = arith.constant 0 : i32
    %10 = arith.cmpi eq, %arg2, %c0_i32_8 : i32
    %11 = arith.extui %10 : i1 to i32
    %c0_i32_9 = arith.constant 0 : i32
    %12 = arith.cmpi ne, %11, %c0_i32_9 : i32
    scf.if %12 {
      %c0_10 = arith.constant 0 : index
      %c0_11 = arith.constant 0 : index
      %13 = vector.load %arg7[%c0_10, %c0_11] : memref<16x96xf32, #tpu.memory_space<vmem>>, vector<16x96xf32>
      %c0_12 = arith.constant 0 : index
      %c0_13 = arith.constant 0 : index
      %14 = vector.load %arg5[%c0_12, %c0_13] : memref<1x96xf32, #tpu.memory_space<vmem>>, vector<1x96xf32>
      %15 = vector.broadcast %14 : vector<1x96xf32> to vector<16x96xf32>
      %16 = arith.addf %13, %15 : vector<16x96xf32>
      %17 = arith.truncf %16 : vector<16x96xf32> to vector<16x96xbf16>
      %c0_14 = arith.constant 0 : index
      %c0_15 = arith.constant 0 : index
      %18 = vector.load %arg6[%c0_14, %c0_15] : memref<16x96xbf16, #tpu.memory_space<vmem>>, vector<16x96xbf16>
      tpu.vector_store %arg6[%c0_14, %c0_15], %17 {strides = array<i32>} : memref<16x96xbf16, #tpu.memory_space<vmem>>, vector<16x96xbf16>,
    } else {
    }
    return
  }
  func.func @transform_0(%arg0: i32, %arg1: i32, %arg2: i32) -> (i32, i32) {
    %c0_i32 = arith.constant 0 : i32
    return %arg0, %arg2 : i32, i32
  }
  func.func @transform_1(%arg0: i32, %arg1: i32, %arg2: i32) -> (i32, i32) {
    %c0_i32 = arith.constant 0 : i32
    return %arg2, %arg1 : i32, i32
  }
  func.func @transform_2(%arg0: i32, %arg1: i32, %arg2: i32) -> (i32, i32) {
    %c0_i32 = arith.constant 0 : i32
    %c0_i32_0 = arith.constant 0 : i32
    return %c0_i32, %arg1 : i32, i32
  }
  func.func @transform_3(%arg0: i32, %arg1: i32, %arg2: i32) -> (i32, i32) {
    %c0_i32 = arith.constant 0 : i32
    return %arg0, %arg1 : i32, i32
  }
}

module attributes {stable_mosaic.version = 11 : i64} {
  func.func @_attn_kernel(%arg0: i32, %arg1: i32, %arg2: memref<1x1x8x8xbf16, #tpu.memory_space<vmem>>, %arg3: memref<1x1x8x8xbf16, #tpu.memory_space<vmem>>, %arg4: memref<1x1x8x8xbf16, #tpu.memory_space<vmem>>, %arg5: memref<1x9x8xbf16, #tpu.memory_space<vmem>>, %arg6: memref<1x1x8x8xbf16, #tpu.memory_space<vmem>>) attributes {dimension_semantics = [#tpu.dimension_semantics<parallel>, #tpu.dimension_semantics<parallel>], iteration_bounds = array<i64: 2, 4>, scalar_prefetch = 0 : i64, scratch_operands = 0 : i64, tpu.core_type = #tpu.core_type<tc>, window_params = [{transform_indices = @transform_0, window_bounds = array<i64: 1, 1, 8, 8>}, {transform_indices = @transform_1, window_bounds = array<i64: 1, 1, 8, 8>}, {transform_indices = @transform_2, window_bounds = array<i64: 1, 1, 8, 8>}, {transform_indices = @transform_3, window_bounds = array<i64: 1, 9, 8>}, {transform_indices = @transform_4, window_bounds = array<i64: 1, 1, 8, 8>}]} {
    %c0 = arith.constant 0 : index
    %c0_0 = arith.constant 0 : index
    %c0_1 = arith.constant 0 : index
    %c0_2 = arith.constant 0 : index
    %0 = vector.load %arg2[%c0, %c0_0, %c0_1, %c0_2] : memref<1x1x8x8xbf16, #tpu.memory_space<vmem>>, vector<1x1x8x8xbf16>
    %1 = vector.shape_cast %0 : vector<1x1x8x8xbf16> to vector<8x8xbf16>
    %c0_3 = arith.constant 0 : index
    %c0_4 = arith.constant 0 : index
    %c0_5 = arith.constant 0 : index
    %c0_6 = arith.constant 0 : index
    %2 = vector.load %arg3[%c0_3, %c0_4, %c0_5, %c0_6] : memref<1x1x8x8xbf16, #tpu.memory_space<vmem>>, vector<1x1x8x8xbf16>
    %3 = vector.shape_cast %2 : vector<1x1x8x8xbf16> to vector<8x8xbf16>
    %c0_7 = arith.constant 0 : index
    %c0_8 = arith.constant 0 : index
    %c0_9 = arith.constant 0 : index
    %c0_10 = arith.constant 0 : index
    %4 = vector.load %arg4[%c0_7, %c0_8, %c0_9, %c0_10] : memref<1x1x8x8xbf16, #tpu.memory_space<vmem>>, vector<1x1x8x8xbf16>
    %5 = vector.shape_cast %4 : vector<1x1x8x8xbf16> to vector<8x8xbf16>
    %c0_11 = arith.constant 0 : index
    %c0_12 = arith.constant 0 : index
    %c0_13 = arith.constant 0 : index
    %6 = vector.load %arg5[%c0_11, %c0_12, %c0_13] : memref<1x9x8xbf16, #tpu.memory_space<vmem>>, vector<1x9x8xbf16>
    %7 = vector.shape_cast %6 : vector<1x9x8xbf16> to vector<9x8xbf16>
    %cst = arith.constant dense<0.000000e+00> : vector<8x8xf32>
    %8 = tpu.matmul %1, %3, %cst {dimension_numbers = #tpu.dot_dimension_numbers<[1], [1], [0], [0], [0, 0, 1, 0], [], []>} : vector<8x8xbf16>, vector<8x8xbf16>, vector<8x8xf32> -> vector<8x8xf32>
    %cst_14 = arith.constant dense<0.000000e+00> : vector<8x9xf32>
    %9 = tpu.matmul %1, %7, %cst_14 {dimension_numbers = #tpu.dot_dimension_numbers<[1], [1], [0], [0], [0, 0, 1, 0], [], []>} : vector<8x8xbf16>, vector<9x8xbf16>, vector<8x9xf32> -> vector<8x9xf32>
    %10 = vector.extract_strided_slice %9 {offsets = [1, 0], sizes = [7, 9], strides = [1, 1]} : vector<8x9xf32> to vector<7x9xf32>
    %11 = vector.extract_strided_slice %9 {offsets = [7, 0], sizes = [1, 9], strides = [1, 1]} : vector<8x9xf32> to vector<1x9xf32>
    %12 = tpu.concatenate %10, %11 in 0 : vector<7x9xf32>, vector<1x9xf32> -> vector<8x9xf32>
    %13 = tpu.concatenate %9, %12 in 1 : vector<8x9xf32>, vector<8x9xf32> -> vector<8x18xf32>
    %14 = tpu.iota {dimensions = array<i32: 0>} : vector<8x18xi32>
    %c8_i32 = arith.constant 8 : i32
    %15 = vector.broadcast %c8_i32 : i32 to vector<8x18xi32>
    %16 = arith.subi %15, %14 : vector<8x18xi32>
    %17 = vector.extract_strided_slice %13 {offsets = [0, 1], sizes = [8, 17], strides = [1, 1]} : vector<8x18xf32> to vector<8x17xf32>
    %18 = vector.extract_strided_slice %13 {offsets = [0, 0], sizes = [8, 1], strides = [1, 1]} : vector<8x18xf32> to vector<8x1xf32>
    %19 = tpu.concatenate %17, %18 in 1 : vector<8x17xf32>, vector<8x1xf32> -> vector<8x18xf32>
    %c1_i32 = arith.constant 1 : i32
    %20 = vector.broadcast %c1_i32 : i32 to vector<8x18xi32>
    %21 = arith.andi %16, %20 : vector<8x18xi32>
    %c0_i32 = arith.constant 0 : i32
    %22 = vector.broadcast %c0_i32 : i32 to vector<8x18xi32>
    %23 = arith.cmpi ne, %21, %22 : vector<8x18xi32>
    %24 = arith.select %23, %19, %13 : vector<8x18xi1>, vector<8x18xf32>
    %25 = vector.extract_strided_slice %24 {offsets = [0, 2], sizes = [8, 16], strides = [1, 1]} : vector<8x18xf32> to vector<8x16xf32>
    %26 = vector.extract_strided_slice %24 {offsets = [0, 0], sizes = [8, 2], strides = [1, 1]} : vector<8x18xf32> to vector<8x2xf32>
    %27 = tpu.concatenate %25, %26 in 1 : vector<8x16xf32>, vector<8x2xf32> -> vector<8x18xf32>
    %c2_i32 = arith.constant 2 : i32
    %28 = vector.broadcast %c2_i32 : i32 to vector<8x18xi32>
    %29 = arith.andi %16, %28 : vector<8x18xi32>
    %c0_i32_15 = arith.constant 0 : i32
    %30 = vector.broadcast %c0_i32_15 : i32 to vector<8x18xi32>
    %31 = arith.cmpi ne, %29, %30 : vector<8x18xi32>
    %32 = arith.select %31, %27, %24 : vector<8x18xi1>, vector<8x18xf32>
    %33 = vector.extract_strided_slice %32 {offsets = [0, 4], sizes = [8, 14], strides = [1, 1]} : vector<8x18xf32> to vector<8x14xf32>
    %34 = vector.extract_strided_slice %32 {offsets = [0, 0], sizes = [8, 4], strides = [1, 1]} : vector<8x18xf32> to vector<8x4xf32>
    %35 = tpu.concatenate %33, %34 in 1 : vector<8x14xf32>, vector<8x4xf32> -> vector<8x18xf32>
    %c4_i32 = arith.constant 4 : i32
    %36 = vector.broadcast %c4_i32 : i32 to vector<8x18xi32>
    %37 = arith.andi %16, %36 : vector<8x18xi32>
    %c0_i32_16 = arith.constant 0 : i32
    %38 = vector.broadcast %c0_i32_16 : i32 to vector<8x18xi32>
    %39 = arith.cmpi ne, %37, %38 : vector<8x18xi32>
    %40 = arith.select %39, %35, %32 : vector<8x18xi1>, vector<8x18xf32>
    %41 = vector.extract_strided_slice %40 {offsets = [0, 8], sizes = [8, 10], strides = [1, 1]} : vector<8x18xf32> to vector<8x10xf32>
    %42 = vector.extract_strided_slice %40 {offsets = [0, 0], sizes = [8, 8], strides = [1, 1]} : vector<8x18xf32> to vector<8x8xf32>
    %43 = tpu.concatenate %41, %42 in 1 : vector<8x10xf32>, vector<8x8xf32> -> vector<8x18xf32>
    %c8_i32_17 = arith.constant 8 : i32
    %44 = vector.broadcast %c8_i32_17 : i32 to vector<8x18xi32>
    %45 = arith.andi %16, %44 : vector<8x18xi32>
    %c0_i32_18 = arith.constant 0 : i32
    %46 = vector.broadcast %c0_i32_18 : i32 to vector<8x18xi32>
    %47 = arith.cmpi ne, %45, %46 : vector<8x18xi32>
    %48 = arith.select %47, %43, %40 : vector<8x18xi1>, vector<8x18xf32>
    %49 = vector.extract_strided_slice %48 {offsets = [0, 0], sizes = [8, 8], strides = [1, 1]} : vector<8x18xf32> to vector<8x8xf32>
    %50 = arith.addf %8, %49 : vector<8x8xf32>
    %cst_19 = arith.constant 0.353553385 : f32
    %51 = vector.broadcast %cst_19 : f32 to vector<8x8xf32>
    %52 = arith.mulf %50, %51 : vector<8x8xf32>
    %cst_20 = arith.constant dense<0xFF800000> : vector<8xf32>
    %53 = vector.multi_reduction <maximumf>, %52, %cst_20 [1] : vector<8x8xf32> to vector<8xf32>
    %54 = vector.shape_cast %53 : vector<8xf32> to vector<8x1xf32>
    %55 = vector.broadcast %54 : vector<8x1xf32> to vector<8x8xf32>
    %56 = arith.subf %52, %55 : vector<8x8xf32>
    %57 = math.exp %56 : vector<8x8xf32>
    %cst_21 = arith.constant dense<0.000000e+00> : vector<8xf32>
    %58 = vector.multi_reduction <add>, %57, %cst_21 [1] : vector<8x8xf32> to vector<8xf32>
    %59 = vector.shape_cast %58 : vector<8xf32> to vector<8x1xf32>
    %60 = tpu.reciprocal %59 {approx = true} : vector<8x1xf32> -> vector<8x1xf32>
    %61 = vector.broadcast %60 : vector<8x1xf32> to vector<8x8xf32>
    %62 = arith.mulf %57, %61 : vector<8x8xf32>
    %63 = arith.truncf %62 : vector<8x8xf32> to vector<8x8xbf16>
    %cst_22 = arith.constant dense<0.000000e+00> : vector<8x8xf32>
    %64 = tpu.matmul %63, %5, %cst_22 {dimension_numbers = #tpu.dot_dimension_numbers<[1], [0], [0], [1], [0, 0, 1, 1], [], []>} : vector<8x8xbf16>, vector<8x8xbf16>, vector<8x8xf32> -> vector<8x8xf32>
    %65 = arith.truncf %64 : vector<8x8xf32> to vector<8x8xbf16>
    %c0_23 = arith.constant 0 : index
    %c0_24 = arith.constant 0 : index
    %c0_25 = arith.constant 0 : index
    %c0_26 = arith.constant 0 : index
    %66 = vector.load %arg6[%c0_23, %c0_24, %c0_25, %c0_26] : memref<1x1x8x8xbf16, #tpu.memory_space<vmem>>, vector<1x1x8x8xbf16>
    %67 = vector.shape_cast %66 : vector<1x1x8x8xbf16> to vector<8x8xbf16>
    %68 = vector.shape_cast %65 : vector<8x8xbf16> to vector<1x1x8x8xbf16>
    tpu.vector_store %arg6[%c0_23, %c0_24, %c0_25, %c0_26], %68 {strides = array<i32>} : memref<1x1x8x8xbf16, #tpu.memory_space<vmem>>, vector<1x1x8x8xbf16>,
    return
  }
  func.func @transform_0(%arg0: i32, %arg1: i32) -> (i32, i32, i32, i32) {
    %c0_i32 = arith.constant 0 : i32
    %c0_i32_0 = arith.constant 0 : i32
    %c0_i32_1 = arith.constant 0 : i32
    return %arg0, %arg1, %c0_i32, %c0_i32_0 : i32, i32, i32, i32
  }
  func.func @transform_1(%arg0: i32, %arg1: i32) -> (i32, i32, i32, i32) {
    %c0_i32 = arith.constant 0 : i32
    %c0_i32_0 = arith.constant 0 : i32
    %c0_i32_1 = arith.constant 0 : i32
    return %arg0, %arg1, %c0_i32, %c0_i32_0 : i32, i32, i32, i32
  }
  func.func @transform_2(%arg0: i32, %arg1: i32) -> (i32, i32, i32, i32) {
    %c0_i32 = arith.constant 0 : i32
    %c0_i32_0 = arith.constant 0 : i32
    %c0_i32_1 = arith.constant 0 : i32
    return %arg0, %arg1, %c0_i32, %c0_i32_0 : i32, i32, i32, i32
  }
  func.func @transform_3(%arg0: i32, %arg1: i32) -> (i32, i32, i32) {
    %c0_i32 = arith.constant 0 : i32
    %c0_i32_0 = arith.constant 0 : i32
    %c0_i32_1 = arith.constant 0 : i32
    return %arg1, %c0_i32, %c0_i32_0 : i32, i32, i32
  }
  func.func @transform_4(%arg0: i32, %arg1: i32) -> (i32, i32, i32, i32) {
    %c0_i32 = arith.constant 0 : i32
    %c0_i32_0 = arith.constant 0 : i32
    %c0_i32_1 = arith.constant 0 : i32
    return %arg0, %arg1, %c0_i32, %c0_i32_0 : i32, i32, i32, i32
  }
}

module attributes {stable_mosaic.version = 11 : i64} {
  func.func @_matmul_bias_kernel(%arg0: i32, %arg1: i32, %arg2: i32, %arg3: memref<16x32xbf16, #tpu.memory_space<vmem>>, %arg4: memref<32x32xbf16, #tpu.memory_space<vmem>>, %arg5: memref<1x32xf32, #tpu.memory_space<vmem>>, %arg6: memref<16x32xbf16, #tpu.memory_space<vmem>>, %arg7: memref<16x32xf32, #tpu.memory_space<vmem>>) attributes {dimension_semantics = [#tpu.dimension_semantics<parallel>, #tpu.dimension_semantics<parallel>, #tpu.dimension_semantics<arbitrary>], iteration_bounds = array<i64: 1, 1, 1>, scalar_prefetch = 0 : i64, scratch_operands = 1 : i64, tpu.core_type = #tpu.core_type<tc>, window_params = [{transform_indices = @transform_0, window_bounds = array<i64: 16, 32>}, {transform_indices = @transform_1, window_bounds = array<i64: 32, 32>}, {transform_indices = @transform_2, window_bounds = array<i64: 1, 32>}, {transform_indices = @transform_3, window_bounds = array<i64: 16, 32>}]} {
    %c0_i32 = arith.constant 0 : i32
    %0 = arith.cmpi eq, %arg2, %c0_i32 : i32
    %1 = arith.extui %0 : i1 to i32
    %c0_i32_0 = arith.constant 0 : i32
    %2 = arith.cmpi ne, %1, %c0_i32_0 : i32
    scf.if %2 {
      %cst_10 = arith.constant 0.000000e+00 : f32
      %12 = vector.broadcast %cst_10 : f32 to vector<16x32xf32>
      %c0_11 = arith.constant 0 : index
      %c0_12 = arith.constant 0 : index
      %13 = vector.load %arg7[%c0_11, %c0_12] : memref<16x32xf32, #tpu.memory_space<vmem>>, vector<16x32xf32>
      tpu.vector_store %arg7[%c0_11, %c0_12], %12 {strides = array<i32>} : memref<16x32xf32, #tpu.memory_space<vmem>>, vector<16x32xf32>,
    } else {
    }
    %c0 = arith.constant 0 : index
    %c0_1 = arith.constant 0 : index
    %3 = vector.load %arg7[%c0, %c0_1] : memref<16x32xf32, #tpu.memory_space<vmem>>, vector<16x32xf32>
    %c0_2 = arith.constant 0 : index
    %c0_3 = arith.constant 0 : index
    %4 = vector.load %arg3[%c0_2, %c0_3] : memref<16x32xbf16, #tpu.memory_space<vmem>>, vector<16x32xbf16>
    %c0_4 = arith.constant 0 : index
    %c0_5 = arith.constant 0 : index
    %5 = vector.load %arg4[%c0_4, %c0_5] : memref<32x32xbf16, #tpu.memory_space<vmem>>, vector<32x32xbf16>
    %cst = arith.constant dense<0.000000e+00> : vector<16x32xf32>
    %6 = tpu.matmul %4, %5, %cst {dimension_numbers = #tpu.dot_dimension_numbers<[1], [0], [0], [1], [0, 0, 1, 1], [], []>} : vector<16x32xbf16>, vector<32x32xbf16>, vector<16x32xf32> -> vector<16x32xf32>
    %7 = arith.addf %3, %6 : vector<16x32xf32>
    %c0_6 = arith.constant 0 : index
    %c0_7 = arith.constant 0 : index
    %8 = vector.load %arg7[%c0_6, %c0_7] : memref<16x32xf32, #tpu.memory_space<vmem>>, vector<16x32xf32>
    tpu.vector_store %arg7[%c0_6, %c0_7], %7 {strides = array<i32>} : memref<16x32xf32, #tpu.memory_space<vmem>>, vector<16x32xf32>,
    %c0_i32_8 = arith.constant 0 : i32
    %9 = arith.cmpi eq, %arg2, %c0_i32_8 : i32
    %10 = arith.extui %9 : i1 to i32
    %c0_i32_9 = arith.constant 0 : i32
    %11 = arith.cmpi ne, %10, %c0_i32_9 : i32
    scf.if %11 {
      %c0_10 = arith.constant 0 : index
      %c0_11 = arith.constant 0 : index
      %12 = vector.load %arg7[%c0_10, %c0_11] : memref<16x32xf32, #tpu.memory_space<vmem>>, vector<16x32xf32>
      %c0_12 = arith.constant 0 : index
      %c0_13 = arith.constant 0 : index
      %13 = vector.load %arg5[%c0_12, %c0_13] : memref<1x32xf32, #tpu.memory_space<vmem>>, vector<1x32xf32>
      %14 = vector.broadcast %13 : vector<1x32xf32> to vector<16x32xf32>
      %15 = arith.addf %12, %14 : vector<16x32xf32>
      %16 = arith.truncf %15 : vector<16x32xf32> to vector<16x32xbf16>
      %c0_14 = arith.constant 0 : index
      %c0_15 = arith.constant 0 : index
      %17 = vector.load %arg6[%c0_14, %c0_15] : memref<16x32xbf16, #tpu.memory_space<vmem>>, vector<16x32xbf16>
      tpu.vector_store %arg6[%c0_14, %c0_15], %16 {strides = array<i32>} : memref<16x32xbf16, #tpu.memory_space<vmem>>, vector<16x32xbf16>,
    } else {
    }
    return
  }
  func.func @transform_0(%arg0: i32, %arg1: i32, %arg2: i32) -> (i32, i32) {
    %c0_i32 = arith.constant 0 : i32
    return %arg0, %arg2 : i32, i32
  }
  func.func @transform_1(%arg0: i32, %arg1: i32, %arg2: i32) -> (i32, i32) {
    %c0_i32 = arith.constant 0 : i32
    return %arg2, %arg1 : i32, i32
  }
  func.func @transform_2(%arg0: i32, %arg1: i32, %arg2: i32) -> (i32, i32) {
    %c0_i32 = arith.constant 0 : i32
    %c0_i32_0 = arith.constant 0 : i32
    return %c0_i32, %arg1 : i32, i32
  }
  func.func @transform_3(%arg0: i32, %arg1: i32, %arg2: i32) -> (i32, i32) {
    %c0_i32 = arith.constant 0 : i32
    return %arg0, %arg1 : i32, i32
  }
}

module attributes {stable_mosaic.version = 11 : i64} {
  func.func @_attn_double_ln_kernel(%arg0: i32, %arg1: memref<16x32xf32, #tpu.memory_space<vmem>>, %arg2: memref<16x32xbf16, #tpu.memory_space<vmem>>, %arg3: memref<1x32xf32, #tpu.memory_space<vmem>>, %arg4: memref<1x32xf32, #tpu.memory_space<vmem>>, %arg5: memref<1x32xf32, #tpu.memory_space<vmem>>, %arg6: memref<1x32xf32, #tpu.memory_space<vmem>>, %arg7: memref<16x32xbf16, #tpu.memory_space<vmem>>) attributes {dimension_semantics = [#tpu.dimension_semantics<parallel>], iteration_bounds = array<i64: 1>, scalar_prefetch = 0 : i64, scratch_operands = 0 : i64, tpu.core_type = #tpu.core_type<tc>, window_params = [{transform_indices = @transform_0, window_bounds = array<i64: 16, 32>}, {transform_indices = @transform_1, window_bounds = array<i64: 16, 32>}, {pipeline_mode = #tpu.pipeline_mode<synchronous>, transform_indices = @transform_2, window_bounds = array<i64: 1, 32>}, {pipeline_mode = #tpu.pipeline_mode<synchronous>, transform_indices = @transform_3, window_bounds = array<i64: 1, 32>}, {pipeline_mode = #tpu.pipeline_mode<synchronous>, transform_indices = @transform_4, window_bounds = array<i64: 1, 32>}, {pipeline_mode = #tpu.pipeline_mode<synchronous>, transform_indices = @transform_5, window_bounds = array<i64: 1, 32>}, {transform_indices = @transform_6, window_bounds = array<i64: 16, 32>}]} {
    %c0 = arith.constant 0 : index
    %c0_0 = arith.constant 0 : index
    %0 = vector.load %arg1[%c0, %c0_0] : memref<16x32xf32, #tpu.memory_space<vmem>>, vector<16x32xf32>
    %c0_1 = arith.constant 0 : index
    %c0_2 = arith.constant 0 : index
    %1 = vector.load %arg2[%c0_1, %c0_2] : memref<16x32xbf16, #tpu.memory_space<vmem>>, vector<16x32xbf16>
    %2 = arith.extf %1 : vector<16x32xbf16> to vector<16x32xf32>
    %3 = arith.addf %0, %2 : vector<16x32xf32>
    %c0_3 = arith.constant 0 : index
    %c0_4 = arith.constant 0 : index
    %4 = vector.load %arg3[%c0_3, %c0_4] : memref<1x32xf32, #tpu.memory_space<vmem>>, vector<1x32xf32>
    %c0_5 = arith.constant 0 : index
    %c0_6 = arith.constant 0 : index
    %5 = vector.load %arg4[%c0_5, %c0_6] : memref<1x32xf32, #tpu.memory_space<vmem>>, vector<1x32xf32>
    %cst = arith.constant dense<0.000000e+00> : vector<16xf32>
    %6 = vector.multi_reduction <add>, %3, %cst [1] : vector<16x32xf32> to vector<16xf32>
    %7 = vector.shape_cast %6 : vector<16xf32> to vector<16x1xf32>
    %cst_7 = arith.constant 3.200000e+01 : f32
    %8 = vector.broadcast %cst_7 : f32 to vector<16x1xf32>
    %9 = arith.divf %7, %8 : vector<16x1xf32>
    %10 = vector.broadcast %9 : vector<16x1xf32> to vector<16x32xf32>
    %11 = arith.subf %3, %10 : vector<16x32xf32>
    %12 = arith.mulf %11, %11 : vector<16x32xf32>
    %cst_8 = arith.constant dense<0.000000e+00> : vector<16xf32>
    %13 = vector.multi_reduction <add>, %12, %cst_8 [1] : vector<16x32xf32> to vector<16xf32>
    %14 = vector.shape_cast %13 : vector<16xf32> to vector<16x1xf32>
    %cst_9 = arith.constant 3.200000e+01 : f32
    %15 = vector.broadcast %cst_9 : f32 to vector<16x1xf32>
    %16 = arith.divf %14, %15 : vector<16x1xf32>
    %cst_10 = arith.constant 9.99999974E-6 : f32
    %17 = vector.broadcast %cst_10 : f32 to vector<16x1xf32>
    %18 = arith.addf %16, %17 : vector<16x1xf32>
    %19 = math.rsqrt %18 : vector<16x1xf32>
    %20 = vector.broadcast %19 : vector<16x1xf32> to vector<16x32xf32>
    %21 = arith.mulf %11, %20 : vector<16x32xf32>
    %22 = vector.broadcast %4 : vector<1x32xf32> to vector<16x32xf32>
    %23 = arith.mulf %21, %22 : vector<16x32xf32>
    %24 = vector.broadcast %5 : vector<1x32xf32> to vector<16x32xf32>
    %25 = arith.addf %23, %24 : vector<16x32xf32>
    %26 = arith.addf %0, %25 : vector<16x32xf32>
    %c0_11 = arith.constant 0 : index
    %c0_12 = arith.constant 0 : index
    %27 = vector.load %arg5[%c0_11, %c0_12] : memref<1x32xf32, #tpu.memory_space<vmem>>, vector<1x32xf32>
    %c0_13 = arith.constant 0 : index
    %c0_14 = arith.constant 0 : index
    %28 = vector.load %arg6[%c0_13, %c0_14] : memref<1x32xf32, #tpu.memory_space<vmem>>, vector<1x32xf32>
    %cst_15 = arith.constant dense<0.000000e+00> : vector<16xf32>
    %29 = vector.multi_reduction <add>, %26, %cst_15 [1] : vector<16x32xf32> to vector<16xf32>
    %30 = vector.shape_cast %29 : vector<16xf32> to vector<16x1xf32>
    %cst_16 = arith.constant 3.200000e+01 : f32
    %31 = vector.broadcast %cst_16 : f32 to vector<16x1xf32>
    %32 = arith.divf %30, %31 : vector<16x1xf32>
    %33 = vector.broadcast %32 : vector<16x1xf32> to vector<16x32xf32>
    %34 = arith.subf %26, %33 : vector<16x32xf32>
    %35 = arith.mulf %34, %34 : vector<16x32xf32>
    %cst_17 = arith.constant dense<0.000000e+00> : vector<16xf32>
    %36 = vector.multi_reduction <add>, %35, %cst_17 [1] : vector<16x32xf32> to vector<16xf32>
    %37 = vector.shape_cast %36 : vector<16xf32> to vector<16x1xf32>
    %cst_18 = arith.constant 3.200000e+01 : f32
    %38 = vector.broadcast %cst_18 : f32 to vector<16x1xf32>
    %39 = arith.divf %37, %38 : vector<16x1xf32>
    %cst_19 = arith.constant 9.99999974E-6 : f32
    %40 = vector.broadcast %cst_19 : f32 to vector<16x1xf32>
    %41 = arith.addf %39, %40 : vector<16x1xf32>
    %42 = math.rsqrt %41 : vector<16x1xf32>
    %43 = vector.broadcast %42 : vector<16x1xf32> to vector<16x32xf32>
    %44 = arith.mulf %34, %43 : vector<16x32xf32>
    %45 = vector.broadcast %27 : vector<1x32xf32> to vector<16x32xf32>
    %46 = arith.mulf %44, %45 : vector<16x32xf32>
    %47 = vector.broadcast %28 : vector<1x32xf32> to vector<16x32xf32>
    %48 = arith.addf %46, %47 : vector<16x32xf32>
    %49 = arith.truncf %48 : vector<16x32xf32> to vector<16x32xbf16>
    %c0_20 = arith.constant 0 : index
    %c0_21 = arith.constant 0 : index
    %50 = vector.load %arg7[%c0_20, %c0_21] : memref<16x32xbf16, #tpu.memory_space<vmem>>, vector<16x32xbf16>
    tpu.vector_store %arg7[%c0_20, %c0_21], %49 {strides = array<i32>} : memref<16x32xbf16, #tpu.memory_space<vmem>>, vector<16x32xbf16>,
    return
  }
  func.func @transform_0(%arg0: i32) -> (i32, i32) {
    %c0_i32 = arith.constant 0 : i32
    %c0_i32_0 = arith.constant 0 : i32
    return %arg0, %c0_i32 : i32, i32
  }
  func.func @transform_1(%arg0: i32) -> (i32, i32) {
    %c0_i32 = arith.constant 0 : i32
    %c0_i32_0 = arith.constant 0 : i32
    return %arg0, %c0_i32 : i32, i32
  }
  func.func @transform_2(%arg0: i32) -> (i32, i32) {
    %c0_i32 = arith.constant 0 : i32
    %c0_i32_0 = arith.constant 0 : i32
    %c0_i32_1 = arith.constant 0 : i32
    return %c0_i32, %c0_i32_0 : i32, i32
  }
  func.func @transform_3(%arg0: i32) -> (i32, i32) {
    %c0_i32 = arith.constant 0 : i32
    %c0_i32_0 = arith.constant 0 : i32
    %c0_i32_1 = arith.constant 0 : i32
    return %c0_i32, %c0_i32_0 : i32, i32
  }
  func.func @transform_4(%arg0: i32) -> (i32, i32) {
    %c0_i32 = arith.constant 0 : i32
    %c0_i32_0 = arith.constant 0 : i32
    %c0_i32_1 = arith.constant 0 : i32
    return %c0_i32, %c0_i32_0 : i32, i32
  }
  func.func @transform_5(%arg0: i32) -> (i32, i32) {
    %c0_i32 = arith.constant 0 : i32
    %c0_i32_0 = arith.constant 0 : i32
    %c0_i32_1 = arith.constant 0 : i32
    return %c0_i32, %c0_i32_0 : i32, i32
  }
  func.func @transform_6(%arg0: i32) -> (i32, i32) {
    %c0_i32 = arith.constant 0 : i32
    %c0_i32_0 = arith.constant 0 : i32
    return %arg0, %c0_i32 : i32, i32
  }
}

module attributes {stable_mosaic.version = 11 : i64} {
  func.func @_matmul_bias_kernel(%arg0: i32, %arg1: i32, %arg2: i32, %arg3: memref<16x32xbf16, #tpu.memory_space<vmem>>, %arg4: memref<32x64xbf16, #tpu.memory_space<vmem>>, %arg5: memref<1x64xf32, #tpu.memory_space<vmem>>, %arg6: memref<16x64xbf16, #tpu.memory_space<vmem>>, %arg7: memref<16x64xf32, #tpu.memory_space<vmem>>) attributes {dimension_semantics = [#tpu.dimension_semantics<parallel>, #tpu.dimension_semantics<parallel>, #tpu.dimension_semantics<arbitrary>], iteration_bounds = array<i64: 1, 1, 1>, scalar_prefetch = 0 : i64, scratch_operands = 1 : i64, tpu.core_type = #tpu.core_type<tc>, window_params = [{transform_indices = @transform_0, window_bounds = array<i64: 16, 32>}, {transform_indices = @transform_1, window_bounds = array<i64: 32, 64>}, {transform_indices = @transform_2, window_bounds = array<i64: 1, 64>}, {transform_indices = @transform_3, window_bounds = array<i64: 16, 64>}]} {
    %c0_i32 = arith.constant 0 : i32
    %0 = arith.cmpi eq, %arg2, %c0_i32 : i32
    %1 = arith.extui %0 : i1 to i32
    %c0_i32_0 = arith.constant 0 : i32
    %2 = arith.cmpi ne, %1, %c0_i32_0 : i32
    scf.if %2 {
      %cst_10 = arith.constant 0.000000e+00 : f32
      %12 = vector.broadcast %cst_10 : f32 to vector<16x64xf32>
      %c0_11 = arith.constant 0 : index
      %c0_12 = arith.constant 0 : index
      %13 = vector.load %arg7[%c0_11, %c0_12] : memref<16x64xf32, #tpu.memory_space<vmem>>, vector<16x64xf32>
      tpu.vector_store %arg7[%c0_11, %c0_12], %12 {strides = array<i32>} : memref<16x64xf32, #tpu.memory_space<vmem>>, vector<16x64xf32>,
    } else {
    }
    %c0 = arith.constant 0 : index
    %c0_1 = arith.constant 0 : index
    %3 = vector.load %arg7[%c0, %c0_1] : memref<16x64xf32, #tpu.memory_space<vmem>>, vector<16x64xf32>
    %c0_2 = arith.constant 0 : index
    %c0_3 = arith.constant 0 : index
    %4 = vector.load %arg3[%c0_2, %c0_3] : memref<16x32xbf16, #tpu.memory_space<vmem>>, vector<16x32xbf16>
    %c0_4 = arith.constant 0 : index
    %c0_5 = arith.constant 0 : index
    %5 = vector.load %arg4[%c0_4, %c0_5] : memref<32x64xbf16, #tpu.memory_space<vmem>>, vector<32x64xbf16>
    %cst = arith.constant dense<0.000000e+00> : vector<16x64xf32>
    %6 = tpu.matmul %4, %5, %cst {dimension_numbers = #tpu.dot_dimension_numbers<[1], [0], [0], [1], [0, 0, 1, 1], [], []>} : vector<16x32xbf16>, vector<32x64xbf16>, vector<16x64xf32> -> vector<16x64xf32>
    %7 = arith.addf %3, %6 : vector<16x64xf32>
    %c0_6 = arith.constant 0 : index
    %c0_7 = arith.constant 0 : index
    %8 = vector.load %arg7[%c0_6, %c0_7] : memref<16x64xf32, #tpu.memory_space<vmem>>, vector<16x64xf32>
    tpu.vector_store %arg7[%c0_6, %c0_7], %7 {strides = array<i32>} : memref<16x64xf32, #tpu.memory_space<vmem>>, vector<16x64xf32>,
    %c0_i32_8 = arith.constant 0 : i32
    %9 = arith.cmpi eq, %arg2, %c0_i32_8 : i32
    %10 = arith.extui %9 : i1 to i32
    %c0_i32_9 = arith.constant 0 : i32
    %11 = arith.cmpi ne, %10, %c0_i32_9 : i32
    scf.if %11 {
      %c0_10 = arith.constant 0 : index
      %c0_11 = arith.constant 0 : index
      %12 = vector.load %arg7[%c0_10, %c0_11] : memref<16x64xf32, #tpu.memory_space<vmem>>, vector<16x64xf32>
      %c0_12 = arith.constant 0 : index
      %c0_13 = arith.constant 0 : index
      %13 = vector.load %arg5[%c0_12, %c0_13] : memref<1x64xf32, #tpu.memory_space<vmem>>, vector<1x64xf32>
      %14 = vector.broadcast %13 : vector<1x64xf32> to vector<16x64xf32>
      %15 = arith.addf %12, %14 : vector<16x64xf32>
      %cst_14 = arith.constant 5.000000e-01 : f32
      %16 = vector.broadcast %cst_14 : f32 to vector<16x64xf32>
      %17 = arith.mulf %16, %15 : vector<16x64xf32>
      %cst_15 = arith.constant 4.471500e-02 : f32
      %18 = vector.broadcast %cst_15 : f32 to vector<16x64xf32>
      %19 = arith.mulf %18, %15 : vector<16x64xf32>
      %20 = arith.mulf %19, %15 : vector<16x64xf32>
      %21 = arith.mulf %20, %15 : vector<16x64xf32>
      %22 = arith.addf %15, %21 : vector<16x64xf32>
      %cst_16 = arith.constant 0.797884583 : f32
      %23 = vector.broadcast %cst_16 : f32 to vector<16x64xf32>
      %24 = arith.mulf %23, %22 : vector<16x64xf32>
      %25 = math.tanh %24 : vector<16x64xf32>
      %cst_17 = arith.constant 1.000000e+00 : f32
      %26 = vector.broadcast %cst_17 : f32 to vector<16x64xf32>
      %27 = arith.addf %26, %25 : vector<16x64xf32>
      %28 = arith.mulf %17, %27 : vector<16x64xf32>
      %29 = arith.truncf %28 : vector<16x64xf32> to vector<16x64xbf16>
      %c0_18 = arith.constant 0 : index
      %c0_19 = arith.constant 0 : index
      %30 = vector.load %arg6[%c0_18, %c0_19] : memref<16x64xbf16, #tpu.memory_space<vmem>>, vector<16x64xbf16>
      tpu.vector_store %arg6[%c0_18, %c0_19], %29 {strides = array<i32>} : memref<16x64xbf16, #tpu.memory_space<vmem>>, vector<16x64xbf16>,
    } else {
    }
    return
  }
  func.func @transform_0(%arg0: i32, %arg1: i32, %arg2: i32) -> (i32, i32) {
    %c0_i32 = arith.constant 0 : i32
    return %arg0, %arg2 : i32, i32
  }
  func.func @transform_1(%arg0: i32, %arg1: i32, %arg2: i32) -> (i32, i32) {
    %c0_i32 = arith.constant 0 : i32
    return %arg2, %arg1 : i32, i32
  }
  func.func @transform_2(%arg0: i32, %arg1: i32, %arg2: i32) -> (i32, i32) {
    %c0_i32 = arith.constant 0 : i32
    %c0_i32_0 = arith.constant 0 : i32
    return %c0_i32, %arg1 : i32, i32
  }
  func.func @transform_3(%arg0: i32, %arg1: i32, %arg2: i32) -> (i32, i32) {
    %c0_i32 = arith.constant 0 : i32
    return %arg0, %arg1 : i32, i32
  }
}

module attributes {stable_mosaic.version = 11 : i64} {
  func.func @_add_ln_kernel(%arg0: i32, %arg1: memref<16x32xbf16, #tpu.memory_space<vmem>>, %arg2: memref<16x32xbf16, #tpu.memory_space<vmem>>, %arg3: memref<1x32xf32, #tpu.memory_space<vmem>>, %arg4: memref<1x32xf32, #tpu.memory_space<vmem>>, %arg5: memref<16x32xf32, #tpu.memory_space<vmem>>) attributes {dimension_semantics = [#tpu.dimension_semantics<parallel>], iteration_bounds = array<i64: 1>, scalar_prefetch = 0 : i64, scratch_operands = 0 : i64, tpu.core_type = #tpu.core_type<tc>, window_params = [{transform_indices = @transform_0, window_bounds = array<i64: 16, 32>}, {transform_indices = @transform_1, window_bounds = array<i64: 16, 32>}, {pipeline_mode = #tpu.pipeline_mode<synchronous>, transform_indices = @transform_2, window_bounds = array<i64: 1, 32>}, {pipeline_mode = #tpu.pipeline_mode<synchronous>, transform_indices = @transform_3, window_bounds = array<i64: 1, 32>}, {transform_indices = @transform_4, window_bounds = array<i64: 16, 32>}]} {
    %c0 = arith.constant 0 : index
    %c0_0 = arith.constant 0 : index
    %0 = vector.load %arg1[%c0, %c0_0] : memref<16x32xbf16, #tpu.memory_space<vmem>>, vector<16x32xbf16>
    %1 = arith.extf %0 : vector<16x32xbf16> to vector<16x32xf32>
    %c0_1 = arith.constant 0 : index
    %c0_2 = arith.constant 0 : index
    %2 = vector.load %arg2[%c0_1, %c0_2] : memref<16x32xbf16, #tpu.memory_space<vmem>>, vector<16x32xbf16>
    %3 = arith.extf %2 : vector<16x32xbf16> to vector<16x32xf32>
    %4 = arith.addf %1, %3 : vector<16x32xf32>
    %c0_3 = arith.constant 0 : index
    %c0_4 = arith.constant 0 : index
    %5 = vector.load %arg3[%c0_3, %c0_4] : memref<1x32xf32, #tpu.memory_space<vmem>>, vector<1x32xf32>
    %c0_5 = arith.constant 0 : index
    %c0_6 = arith.constant 0 : index
    %6 = vector.load %arg4[%c0_5, %c0_6] : memref<1x32xf32, #tpu.memory_space<vmem>>, vector<1x32xf32>
    %cst = arith.constant dense<0.000000e+00> : vector<16xf32>
    %7 = vector.multi_reduction <add>, %4, %cst [1] : vector<16x32xf32> to vector<16xf32>
    %8 = vector.shape_cast %7 : vector<16xf32> to vector<16x1xf32>
    %cst_7 = arith.constant 3.200000e+01 : f32
    %9 = vector.broadcast %cst_7 : f32 to vector<16x1xf32>
    %10 = arith.divf %8, %9 : vector<16x1xf32>
    %11 = vector.broadcast %10 : vector<16x1xf32> to vector<16x32xf32>
    %12 = arith.subf %4, %11 : vector<16x32xf32>
    %13 = arith.mulf %12, %12 : vector<16x32xf32>
    %cst_8 = arith.constant dense<0.000000e+00> : vector<16xf32>
    %14 = vector.multi_reduction <add>, %13, %cst_8 [1] : vector<16x32xf32> to vector<16xf32>
    %15 = vector.shape_cast %14 : vector<16xf32> to vector<16x1xf32>
    %cst_9 = arith.constant 3.200000e+01 : f32
    %16 = vector.broadcast %cst_9 : f32 to vector<16x1xf32>
    %17 = arith.divf %15, %16 : vector<16x1xf32>
    %cst_10 = arith.constant 9.99999974E-6 : f32
    %18 = vector.broadcast %cst_10 : f32 to vector<16x1xf32>
    %19 = arith.addf %17, %18 : vector<16x1xf32>
    %20 = math.rsqrt %19 : vector<16x1xf32>
    %21 = vector.broadcast %20 : vector<16x1xf32> to vector<16x32xf32>
    %22 = arith.mulf %12, %21 : vector<16x32xf32>
    %23 = vector.broadcast %5 : vector<1x32xf32> to vector<16x32xf32>
    %24 = arith.mulf %22, %23 : vector<16x32xf32>
    %25 = vector.broadcast %6 : vector<1x32xf32> to vector<16x32xf32>
    %26 = arith.addf %24, %25 : vector<16x32xf32>
    %c0_11 = arith.constant 0 : index
    %c0_12 = arith.constant 0 : index
    %27 = vector.load %arg5[%c0_11, %c0_12] : memref<16x32xf32, #tpu.memory_space<vmem>>, vector<16x32xf32>
    tpu.vector_store %arg5[%c0_11, %c0_12], %26 {strides = array<i32>} : memref<16x32xf32, #tpu.memory_space<vmem>>, vector<16x32xf32>,
    return
  }
  func.func @transform_0(%arg0: i32) -> (i32, i32) {
    %c0_i32 = arith.constant 0 : i32
    %c0_i32_0 = arith.constant 0 : i32
    return %arg0, %c0_i32 : i32, i32
  }
  func.func @transform_1(%arg0: i32) -> (i32, i32) {
    %c0_i32 = arith.constant 0 : i32
    %c0_i32_0 = arith.constant 0 : i32
    return %arg0, %c0_i32 : i32, i32
  }
  func.func @transform_2(%arg0: i32) -> (i32, i32) {
    %c0_i32 = arith.constant 0 : i32
    %c0_i32_0 = arith.constant 0 : i32
    %c0_i32_1 = arith.constant 0 : i32
    return %c0_i32, %c0_i32_0 : i32, i32
  }
  func.func @transform_3(%arg0: i32) -> (i32, i32) {
    %c0_i32 = arith.constant 0 : i32
    %c0_i32_0 = arith.constant 0 : i32
    %c0_i32_1 = arith.constant 0 : i32
    return %c0_i32, %c0_i32_0 : i32, i32
  }
  func.func @transform_4(%arg0: i32) -> (i32, i32) {
    %c0_i32 = arith.constant 0 : i32
    %c0_i32_0 = arith.constant 0 : i32
    return %arg0, %c0_i32 : i32, i32
  }
}

module attributes {stable_mosaic.version = 11 : i64} {
  func.func @_matmul_bias_kernel(%arg0: i32, %arg1: i32, %arg2: i32, %arg3: memref<16x64xbf16, #tpu.memory_space<vmem>>, %arg4: memref<64x32xbf16, #tpu.memory_space<vmem>>, %arg5: memref<1x32xf32, #tpu.memory_space<vmem>>, %arg6: memref<16x32xbf16, #tpu.memory_space<vmem>>, %arg7: memref<16x32xf32, #tpu.memory_space<vmem>>) attributes {dimension_semantics = [#tpu.dimension_semantics<parallel>, #tpu.dimension_semantics<parallel>, #tpu.dimension_semantics<arbitrary>], iteration_bounds = array<i64: 1, 1, 1>, scalar_prefetch = 0 : i64, scratch_operands = 1 : i64, tpu.core_type = #tpu.core_type<tc>, window_params = [{transform_indices = @transform_0, window_bounds = array<i64: 16, 64>}, {transform_indices = @transform_1, window_bounds = array<i64: 64, 32>}, {transform_indices = @transform_2, window_bounds = array<i64: 1, 32>}, {transform_indices = @transform_3, window_bounds = array<i64: 16, 32>}]} {
    %c0_i32 = arith.constant 0 : i32
    %0 = arith.cmpi eq, %arg2, %c0_i32 : i32
    %1 = arith.extui %0 : i1 to i32
    %c0_i32_0 = arith.constant 0 : i32
    %2 = arith.cmpi ne, %1, %c0_i32_0 : i32
    scf.if %2 {
      %cst_10 = arith.constant 0.000000e+00 : f32
      %12 = vector.broadcast %cst_10 : f32 to vector<16x32xf32>
      %c0_11 = arith.constant 0 : index
      %c0_12 = arith.constant 0 : index
      %13 = vector.load %arg7[%c0_11, %c0_12] : memref<16x32xf32, #tpu.memory_space<vmem>>, vector<16x32xf32>
      tpu.vector_store %arg7[%c0_11, %c0_12], %12 {strides = array<i32>} : memref<16x32xf32, #tpu.memory_space<vmem>>, vector<16x32xf32>,
    } else {
    }
    %c0 = arith.constant 0 : index
    %c0_1 = arith.constant 0 : index
    %3 = vector.load %arg7[%c0, %c0_1] : memref<16x32xf32, #tpu.memory_space<vmem>>, vector<16x32xf32>
    %c0_2 = arith.constant 0 : index
    %c0_3 = arith.constant 0 : index
    %4 = vector.load %arg3[%c0_2, %c0_3] : memref<16x64xbf16, #tpu.memory_space<vmem>>, vector<16x64xbf16>
    %c0_4 = arith.constant 0 : index
    %c0_5 = arith.constant 0 : index
    %5 = vector.load %arg4[%c0_4, %c0_5] : memref<64x32xbf16, #tpu.memory_space<vmem>>, vector<64x32xbf16>
    %cst = arith.constant dense<0.000000e+00> : vector<16x32xf32>
    %6 = tpu.matmul %4, %5, %cst {dimension_numbers = #tpu.dot_dimension_numbers<[1], [0], [0], [1], [0, 0, 1, 1], [], []>} : vector<16x64xbf16>, vector<64x32xbf16>, vector<16x32xf32> -> vector<16x32xf32>
    %7 = arith.addf %3, %6 : vector<16x32xf32>
    %c0_6 = arith.constant 0 : index
    %c0_7 = arith.constant 0 : index
    %8 = vector.load %arg7[%c0_6, %c0_7] : memref<16x32xf32, #tpu.memory_space<vmem>>, vector<16x32xf32>
    tpu.vector_store %arg7[%c0_6, %c0_7], %7 {strides = array<i32>} : memref<16x32xf32, #tpu.memory_space<vmem>>, vector<16x32xf32>,
    %c0_i32_8 = arith.constant 0 : i32
    %9 = arith.cmpi eq, %arg2, %c0_i32_8 : i32
    %10 = arith.extui %9 : i1 to i32
    %c0_i32_9 = arith.constant 0 : i32
    %11 = arith.cmpi ne, %10, %c0_i32_9 : i32
    scf.if %11 {
      %c0_10 = arith.constant 0 : index
      %c0_11 = arith.constant 0 : index
      %12 = vector.load %arg7[%c0_10, %c0_11] : memref<16x32xf32, #tpu.memory_space<vmem>>, vector<16x32xf32>
      %c0_12 = arith.constant 0 : index
      %c0_13 = arith.constant 0 : index
      %13 = vector.load %arg5[%c0_12, %c0_13] : memref<1x32xf32, #tpu.memory_space<vmem>>, vector<1x32xf32>
      %14 = vector.broadcast %13 : vector<1x32xf32> to vector<16x32xf32>
      %15 = arith.addf %12, %14 : vector<16x32xf32>
      %16 = arith.truncf %15 : vector<16x32xf32> to vector<16x32xbf16>
      %c0_14 = arith.constant 0 : index
      %c0_15 = arith.constant 0 : index
      %17 = vector.load %arg6[%c0_14, %c0_15] : memref<16x32xbf16, #tpu.memory_space<vmem>>, vector<16x32xbf16>
      tpu.vector_store %arg6[%c0_14, %c0_15], %16 {strides = array<i32>} : memref<16x32xbf16, #tpu.memory_space<vmem>>, vector<16x32xbf16>,
    } else {
    }
    return
  }
  func.func @transform_0(%arg0: i32, %arg1: i32, %arg2: i32) -> (i32, i32) {
    %c0_i32 = arith.constant 0 : i32
    return %arg0, %arg2 : i32, i32
  }
  func.func @transform_1(%arg0: i32, %arg1: i32, %arg2: i32) -> (i32, i32) {
    %c0_i32 = arith.constant 0 : i32
    return %arg2, %arg1 : i32, i32
  }
  func.func @transform_2(%arg0: i32, %arg1: i32, %arg2: i32) -> (i32, i32) {
    %c0_i32 = arith.constant 0 : i32
    %c0_i32_0 = arith.constant 0 : i32
    return %c0_i32, %arg1 : i32, i32
  }
  func.func @transform_3(%arg0: i32, %arg1: i32, %arg2: i32) -> (i32, i32) {
    %c0_i32 = arith.constant 0 : i32
    return %arg0, %arg1 : i32, i32
  }
}

</mosaic_0001>

<llo_original>
// kernel: transformer_xl_decoder_layer.9
$region0: #{transformer_xl_decoder_layer.9}
  #allocation0 [shape = 'u32[]', space=smem, size = 0x4, offset = 0x4, fixed_abs, tag = 'smem constant byte address 0x4 - core index']
  #allocation1 [shape = 'u32[144,128]{1,0:T(1,128)}', space=vmem, size = 0x12000, scoped, tag = 'internal scratch']
  #allocation2 [shape = 'f32[16,96]{1,0:T(8,128)}', space=vmem, size = 0x2000, scoped, tag = 'scratch operand']
  %s0 = inlined_call_operand.vmem [shape: f32[16,32], index: 0, kind: input, shape index: {}]
  %s1 = inlined_call_operand.vmem [shape: bf16[32,96], index: 1, kind: input, shape index: {}]
  %s2 = inlined_call_operand.vmem [shape: f32[1,96], index: 2, kind: input, shape index: {}]
  %s3 = inlined_call_operand.vmem [shape: bf16[16,96], index: 3, kind: output, shape index: {}]
  %s4 = sld [smem:[#allocation0]]
  $region30: #{transformer_xl_decoder_layer.9} parent=0
    _
  %s6 = ssub.s32 1, %s4
  %s7 = scalar_select 0, %s6, %s4
  // Predicated region
  $region2: #{transformer_xl_decoder_layer.9} parent=0 // pred_check
    _
  $region3: #{transformer_xl_decoder_layer.9} parent=0 // pred_check_branch
    %9 = sbr.rel (0) target = $region5
  $region4: #{transformer_xl_decoder_layer.9} parent=0 // pred_region
    _
  $region5: #{transformer_xl_decoder_layer.9} parent=0 // pred_fallthru
    _
  // Predicated region
  $region6: #{transformer_xl_decoder_layer.9} parent=0 // pred_check
    _
  $region7: #{transformer_xl_decoder_layer.9} parent=0 // pred_check_branch
    %11 = sbr.rel (0) target = $region9
  $region8: #{transformer_xl_decoder_layer.9} parent=0 // pred_region
    _
  $region9: #{transformer_xl_decoder_layer.9} parent=0 // pred_fallthru
    _
  // Predicated region
  $region10: #{transformer_xl_decoder_layer.9} parent=0 // pred_check
    _
  $region11: #{transformer_xl_decoder_layer.9} parent=0 // pred_check_branch
    %13 = sbr.rel (0) target = $region13
  $region12: #{transformer_xl_decoder_layer.9} parent=0 // pred_region
    _
  $region13: #{transformer_xl_decoder_layer.9} parent=0 // pred_fallthru
    _
  %p15 = scmp.eq.s32.totalorder 0, 0
  // Predicated region
  $region14: #{transformer_xl_decoder_layer.9} parent=0 // pred_check
    %p16 = pneg %p15
  $region15: #{transformer_xl_decoder_layer.9} parent=0 // pred_check_branch
    %18 = sbr.rel (%p16) target = $region17
  $region16: #{transformer_xl_decoder_layer.9} parent=0 // pred_region
    %vm19 = vcmask 785408
    %20 = vst.msk [vmem:[#allocation2] sm:$0xff] %vm19, 0.0
    %21 = vst.msk [vmem:[#allocation2 + $0x8] sm:$0xff] %vm19, 0.0
  $region17: #{transformer_xl_decoder_layer.9} parent=0 // pred_fallthru
    _
  %v22 = vld [vmem:[#allocation2] sm:$0xff]
  %v23 = vld [vmem:[#allocation2 + $0x8] sm:$0xff]
  %v24 = vld [vmem:[%s0] sm:$0xff]
  %v25 = vld [vmem:[%s0 + $0x8] sm:$0xff]
  %v26 = vpack.c.bf16 %v25, %v24
  %v27 = vld [vmem:[%s1] sm:$0xf]
  %v28 = vld [vmem:[%s1 + $0x4] sm:$0xf]
  %v29 = vld [vmem:[%s1 + $0x8] sm:$0xf]
  %v30 = vld [vmem:[%s1 + $0xc] sm:$0xf]
  %v35 = vunpack.c.l.b16 %v27
  %v36 = vunpack.c.l.b16 %v28
  %v37 = vunpack.c.l.b16 %v29
  %v38 = vunpack.c.l.b16 %v30
  %v39 = vpack.c.b16 %v36, %v35
  %v40 = vpack.c.b16 %v38, %v37
  %vm43 = vcmask 261120
  %v45 = vsel %vm43, %v26, 0
  %47 = vmatprep.subr.bf16.mxu0 0
  %48 = vmatpush1.bf16.msra.mxu0 %v39
  %49 = vmatprep.subr.bf16.mxu0 0
  %50 = vmatpush1.bf16.msra.mxu0 %v40
  %51 = vmatprep.subr.bf16.mxu0 0
  %52 = vmatpush1.bf16.msra.mxu0 0
  %53 = vmatprep.subr.bf16.mxu0 0
  %54 = vmatpush1.bf16.msra.mxu0 0
  %55 = vmatprep.subr.bf16.mxu0 0
  %56 = vmatpush1.bf16.msra.mxu0 0
  %57 = vmatprep.subr.bf16.mxu0 0
  %58 = vmatpush1.bf16.msra.mxu0 0
  %59 = vmatprep.subr.bf16.mxu0 0
  %60 = vmatpush1.bf16.msra.mxu0 0
  %61 = vmatprep.subr.bf16.mxu0 0
  %62 = vmatpush1.bf16.msra.mxu0 0
  %63 = vmatprep.subr.bf16.mxu0 0
  %64 = vmatpush1.bf16.msra.mxu0 0
  %65 = vmatprep.subr.bf16.mxu0 0
  %66 = vmatpush1.bf16.msra.mxu0 0
  %67 = vmatprep.subr.bf16.mxu0 0
  %68 = vmatpush1.bf16.msra.mxu0 0
  %69 = vmatprep.subr.bf16.mxu0 0
  %70 = vmatpush1.bf16.msra.mxu0 0
  %71 = vmatprep.subr.bf16.mxu0 0
  %72 = vmatpush1.bf16.msra.mxu0 0
  %73 = vmatprep.subr.bf16.mxu0 0
  %74 = vmatpush1.bf16.msra.mxu0 0
  %75 = vmatprep.subr.bf16.mxu0 0
  %76 = vmatpush1.bf16.msra.mxu0 0
  %77 = vmatprep.subr.bf16.mxu0 0
  %78 = vmatpush1.bf16.msra.mxu0 0
  %79 = vmatprep.mubr.bf16.mxu0 0
  %80 = vmatmul.mubr.bf16.gmra.mrb[0].mxu0 %v45
  %v81 = vpop.f32.mrb[0].mxu0
  %v82 = vadd.f32 0.0, %v81
  %v83 = vpop.f32.mrb[0].mxu0
  %v84 = vpop.f32.mrb[0].mxu0
  %v85 = vadd.f32 0.0, %v84
  %v86 = vpop.f32.mrb[0].mxu0
  %87 = vdwg.mxu0
  %v88 = vadd.f32 %v22, %v82
  %v89 = vadd.f32 %v23, %v85
  %vm90 = vcmask 785408
  %91 = vst.msk [vmem:[#allocation2] sm:$0xff] %vm90, %v88
  %92 = vst.msk [vmem:[#allocation2 + $0x8] sm:$0xff] %vm90, %v89
  // Predicated region
  $region18: #{transformer_xl_decoder_layer.9} parent=0 // pred_check
    %p93 = pneg %p15
  $region19: #{transformer_xl_decoder_layer.9} parent=0 // pred_check_branch
    %95 = sbr.rel (%p93) target = $region21
  $region20: #{transformer_xl_decoder_layer.9} parent=0 // pred_region
    %v96 = vld [vmem:[#allocation2] sm:$0xff]
    %v97 = vld [vmem:[#allocation2 + $0x8] sm:$0xff]
    %v98 = vld [vmem:[%s2] sm:$0x1]
    %v100 = vlaneseq
    %v101 = vshrl.u32 %v100, 7
    %v102 = vsub.s32 0, %v101
    %v103 = vrot.slane %v98, %v102
    %v105 = vadd.f32 %v96, %v103
    %v106 = vadd.f32 %v97, %v103
    %v107 = vpack.c.bf16 %v106, %v105
    %v109 = vunpack.c.l.b16 %v107
    %v110 = vunpack.c.h.b16 %v107
    %v111 = vpack.c.b16 %v109, %v109
    %v112 = vpack.c.b16 %v110, %v110
    %vm115 = vcmask 781312
    %116 = vst.msk [vmem:[%s3] sm:$0xf] %vm115, %v111
    %117 = vst.msk [vmem:[%s3 + $0x4] sm:$0xf] %vm115, %v112
  $region21: #{transformer_xl_decoder_layer.9} parent=0 // pred_fallthru
    _
  // Predicated region
  $region22: #{transformer_xl_decoder_layer.9} parent=0 // pred_check
    _
  $region23: #{transformer_xl_decoder_layer.9} parent=0 // pred_check_branch
    %119 = sbr.rel (0) target = $region25
  $region24: #{transformer_xl_decoder_layer.9} parent=0 // pred_region
    _
  $region25: #{transformer_xl_decoder_layer.9} parent=0 // pred_fallthru
    _
  // Predicated region
  $region26: #{transformer_xl_decoder_layer.9} parent=0 // pred_check
    _
  $region27: #{transformer_xl_decoder_layer.9} parent=0 // pred_check_branch
    %121 = sbr.rel (0) target = $region29
  $region28: #{transformer_xl_decoder_layer.9} parent=0 // pred_region
    _
  $region29: #{transformer_xl_decoder_layer.9} parent=0 // pred_fallthru
    _

// kernel: transformer_xl_decoder_layer.8
$region0: #{transformer_xl_decoder_layer.8}
  #allocation0 [shape = 'u32[]', space=smem, size = 0x4, offset = 0x4, fixed_abs, tag = 'smem constant byte address 0x4 - core index']
  #allocation1 [shape = 'u32[144,128]{1,0:T(1,128)}', space=vmem, size = 0x12000, scoped, tag = 'internal scratch']
  #allocation2 [shape = 'f32[9,96]{1,0:T(8,128)}', space=vmem, size = 0x2000, scoped, tag = 'scratch operand']
  %s0 = inlined_call_operand.vmem [shape: f32[9,32], index: 0, kind: input, shape index: {}]
  %s1 = inlined_call_operand.vmem [shape: bf16[32,96], index: 1, kind: input, shape index: {}]
  %s2 = inlined_call_operand.vmem [shape: bf16[9,96], index: 2, kind: output, shape index: {}]
  %s3 = sld [smem:[#allocation0]]
  $region26: #{transformer_xl_decoder_layer.8} parent=0
    _
  %s5 = ssub.s32 1, %s3
  %s6 = scalar_select 0, %s5, %s3
  // Predicated region
  $region2: #{transformer_xl_decoder_layer.8} parent=0 // pred_check
    _
  $region3: #{transformer_xl_decoder_layer.8} parent=0 // pred_check_branch
    %8 = sbr.rel (0) target = $region5
  $region4: #{transformer_xl_decoder_layer.8} parent=0 // pred_region
    _
  $region5: #{transformer_xl_decoder_layer.8} parent=0 // pred_fallthru
    _
  // Predicated region
  $region6: #{transformer_xl_decoder_layer.8} parent=0 // pred_check
    _
  $region7: #{transformer_xl_decoder_layer.8} parent=0 // pred_check_branch
    %10 = sbr.rel (0) target = $region9
  $region8: #{transformer_xl_decoder_layer.8} parent=0 // pred_region
    _
  $region9: #{transformer_xl_decoder_layer.8} parent=0 // pred_fallthru
    _
  %p12 = scmp.eq.s32.totalorder 0, 0
  // Predicated region
  $region10: #{transformer_xl_decoder_layer.8} parent=0 // pred_check
    %p13 = pneg %p12
  $region11: #{transformer_xl_decoder_layer.8} parent=0 // pred_check_branch
    %15 = sbr.rel (%p13) target = $region13
  $region12: #{transformer_xl_decoder_layer.8} parent=0 // pred_region
    %vm16 = vcmask 785408
    %17 = vst.msk [vmem:[#allocation2] sm:$0xff] %vm16, 0.0
    %vm18 = vcmask 778240
    %19 = vst.msk [vmem:[#allocation2 + $0x8] sm:$0x1] %vm18, 0.0
  $region13: #{transformer_xl_decoder_layer.8} parent=0 // pred_fallthru
    _
  %v20 = vld [vmem:[#allocation2] sm:$0xff]
  %v21 = vld [vmem:[#allocation2 + $0x8] sm:$0x1]
  %v22 = vld [vmem:[%s0] sm:$0xff]
  %v23 = vld [vmem:[%s0 + $0x8] sm:$0x1]
  %v24 = vpack.c.bf16 %v23, %v22
  %v25 = vld [vmem:[%s1] sm:$0xf]
  %v26 = vld [vmem:[%s1 + $0x4] sm:$0xf]
  %v27 = vld [vmem:[%s1 + $0x8] sm:$0xf]
  %v28 = vld [vmem:[%s1 + $0xc] sm:$0xf]
  %v33 = vunpack.c.l.b16 %v25
  %v34 = vunpack.c.l.b16 %v26
  %v35 = vunpack.c.l.b16 %v27
  %v36 = vunpack.c.l.b16 %v28
  %v37 = vpack.c.b16 %v34, %v33
  %v38 = vpack.c.b16 %v36, %v35
  %vm41 = vcmask 261120
  %v43 = vsel %vm41, %v24, 0
  %45 = vmatprep.subr.bf16.mxu0 0
  %46 = vmatpush1.bf16.msra.mxu0 %v37
  %47 = vmatprep.subr.bf16.mxu0 0
  %48 = vmatpush1.bf16.msra.mxu0 %v38
  %49 = vmatprep.subr.bf16.mxu0 0
  %50 = vmatpush1.bf16.msra.mxu0 0
  %51 = vmatprep.subr.bf16.mxu0 0
  %52 = vmatpush1.bf16.msra.mxu0 0
  %53 = vmatprep.subr.bf16.mxu0 0
  %54 = vmatpush1.bf16.msra.mxu0 0
  %55 = vmatprep.subr.bf16.mxu0 0
  %56 = vmatpush1.bf16.msra.mxu0 0
  %57 = vmatprep.subr.bf16.mxu0 0
  %58 = vmatpush1.bf16.msra.mxu0 0
  %59 = vmatprep.subr.bf16.mxu0 0
  %60 = vmatpush1.bf16.msra.mxu0 0
  %61 = vmatprep.subr.bf16.mxu0 0
  %62 = vmatpush1.bf16.msra.mxu0 0
  %63 = vmatprep.subr.bf16.mxu0 0
  %64 = vmatpush1.bf16.msra.mxu0 0
  %65 = vmatprep.subr.bf16.mxu0 0
  %66 = vmatpush1.bf16.msra.mxu0 0
  %67 = vmatprep.subr.bf16.mxu0 0
  %68 = vmatpush1.bf16.msra.mxu0 0
  %69 = vmatprep.subr.bf16.mxu0 0
  %70 = vmatpush1.bf16.msra.mxu0 0
  %71 = vmatprep.subr.bf16.mxu0 0
  %72 = vmatpush1.bf16.msra.mxu0 0
  %73 = vmatprep.subr.bf16.mxu0 0
  %74 = vmatpush1.bf16.msra.mxu0 0
  %75 = vmatprep.subr.bf16.mxu0 0
  %76 = vmatpush1.bf16.msra.mxu0 0
  %77 = vmatprep.mubr.bf16.mxu0 0
  %78 = vmatmul.mubr.bf16.gmra.mrb[0].mxu0 %v43
  %v79 = vpop.f32.mrb[0].mxu0
  %v80 = vadd.f32 0.0, %v79
  %v81 = vpop.f32.mrb[0].mxu0
  %v82 = vpop.f32.mrb[0].mxu0
  %v83 = vadd.f32 0.0, %v82
  %v84 = vpop.f32.mrb[0].mxu0
  %85 = vdwg.mxu0
  %v86 = vadd.f32 %v20, %v80
  %v87 = vadd.f32 %v21, %v83
  %vm88 = vcmask 785408
  %89 = vst.msk [vmem:[#allocation2] sm:$0xff] %vm88, %v86
  %vm90 = vcmask 778240
  %91 = vst.msk [vmem:[#allocation2 + $0x8] sm:$0x1] %vm90, %v87
  // Predicated region
  $region14: #{transformer_xl_decoder_layer.8} parent=0 // pred_check
    %p92 = pneg %p12
  $region15: #{transformer_xl_decoder_layer.8} parent=0 // pred_check_branch
    %94 = sbr.rel (%p92) target = $region17
  $region16: #{transformer_xl_decoder_layer.8} parent=0 // pred_region
    %v95 = vld [vmem:[#allocation2] sm:$0xff]
    %v96 = vld [vmem:[#allocation2 + $0x8] sm:$0x1]
    %v97 = vpack.c.bf16 %v96, %v95
    %v99 = vunpack.c.l.b16 %v97
    %v100 = vunpack.c.h.b16 %v97
    %v101 = vpack.c.b16 %v99, %v99
    %v102 = vpack.c.b16 %v100, %v100
    %vm105 = vcmask 781312
    %106 = vst.msk [vmem:[%s2] sm:$0xf] %vm105, %v101
    %vm107 = vcmask 778240
    %vm108 = vsmask.f32 256
    %vm109 = vmand %vm107, %vm108
    %v110 = vld [vmem:[%s2 + $0x4] sm:$0x1]
    %v111 = vsel %vm109, %v102, %v110
    %112 = vst [vmem:[%s2 + $0x4] sm:$0x1] %v111
  $region17: #{transformer_xl_decoder_layer.8} parent=0 // pred_fallthru
    _
  // Predicated region
  $region18: #{transformer_xl_decoder_layer.8} parent=0 // pred_check
    _
  $region19: #{transformer_xl_decoder_layer.8} parent=0 // pred_check_branch
    %114 = sbr.rel (0) target = $region21
  $region20: #{transformer_xl_decoder_layer.8} parent=0 // pred_region
    _
  $region21: #{transformer_xl_decoder_layer.8} parent=0 // pred_fallthru
    _
  // Predicated region
  $region22: #{transformer_xl_decoder_layer.8} parent=0 // pred_check
    _
  $region23: #{transformer_xl_decoder_layer.8} parent=0 // pred_check_branch
    %116 = sbr.rel (0) target = $region25
  $region24: #{transformer_xl_decoder_layer.8} parent=0 // pred_region
    _
  $region25: #{transformer_xl_decoder_layer.8} parent=0 // pred_fallthru
    _

// kernel: transformer_xl_decoder_layer.10
$region0: #{transformer_xl_decoder_layer.10}
  #allocation0 [shape = 'u32[]', space=smem, size = 0x4, offset = 0x4, fixed_abs, tag = 'smem constant byte address 0x4 - core index']
  #allocation1 [shape = 'u32[144,128]{1,0:T(1,128)}', space=vmem, size = 0x12000, scoped, tag = 'internal scratch']
  %s0 = inlined_call_operand.hbm [shape: bf16[2,4,8,8], index: 0, kind: input, shape index: {}]
  %s1 = inlined_call_operand.hbm [shape: bf16[2,4,8,8], index: 1, kind: input, shape index: {}]
  %s2 = inlined_call_operand.hbm [shape: bf16[2,4,8,8], index: 2, kind: input, shape index: {}]
  %s3 = inlined_call_operand.hbm [shape: bf16[4,9,8], index: 3, kind: input, shape index: {}]
  %s4 = inlined_call_operand.hbm [shape: bf16[2,4,8,8], index: 4, kind: output, shape index: {}]
  %s5 = sld [smem:[#allocation0]]
  $region65: #{transformer_xl_decoder_layer.10} parent=0
    _
  %s7 = ssub.s32 1, %s5
  %s8 = scalar_select 0, %s7, %s5
  $region1: #{transformer_xl_decoder_layer.10} parent=0
    #allocation2 [shape = 'u8[4096]{0}', space=vmem, size = 0x1000, scoped, tag = 'input window, operand 0']
    #allocation3 [shape = 's32[2]{0}', space=sflag, size = 0x8, scoped, tag = 'scoped memory for transformer_xl_decoder_layer.10']
    #allocation4 [shape = 's32[2]{0}', space=sflag, size = 0x8, scoped, tag = 'scoped memory for transformer_xl_decoder_layer.10']
    #allocation5 [shape = 'u8[4096]{0}', space=vmem, size = 0x1000, scoped, tag = 'input window, operand 1']
    #allocation6 [shape = 's32[2]{0}', space=sflag, size = 0x8, scoped, tag = 'scoped memory for transformer_xl_decoder_layer.10']
    #allocation7 [shape = 'u8[4096]{0}', space=vmem, size = 0x1000, scoped, tag = 'input window, operand 2']
    #allocation8 [shape = 'u8[8192]{0}', space=vmem, size = 0x2000, scoped, tag = 'input window, operand 3']
    #allocation9 [shape = 's32[2]{0}', space=sflag, size = 0x8, scoped, tag = 'scoped memory for transformer_xl_decoder_layer.10']
    #allocation10 [shape = 'u8[4096]{0}', space=vmem, size = 0x1000, scoped, tag = 'output window, operand 0']
    %9 = vsyncpa [#allocation3], 0
    %s10 = scalar_lea.sflag [#allocation3], 1
    %11 = vsyncpa %s10, 0
    %12 = vsyncpa [#allocation6], 0
    %s13 = scalar_lea.sflag [#allocation6], 1
    %14 = vsyncpa %s13, 0
    %15 = vsyncpa [#allocation9], 0
    %s16 = scalar_lea.sflag [#allocation9], 1
    %17 = vsyncpa %s16, 0
    %18 = vsyncpa [#allocation4], 0
    %s19 = scalar_lea.sflag [#allocation4], 1
    %20 = vsyncpa %s19, 0
    loop: start=0, step=1, limit=10
    $region2: #{transformer_xl_decoder_layer.10} parent=1 // loop_pre_header
      _
    $region3: #{transformer_xl_decoder_layer.10} parent=1 // loop_header
      %s22 = sphi 0, %s26
      %p23 = scmp.ge.s32.totalorder %s22, 10
      %s29 = sphi 0, %s41
      %s30 = sphi 0, %s37
      %s31 = sphi 0, %s29
      %s32 = sphi 0, %s30
      %s33 = sphi 0, %s31
      %s34 = sphi 0, %s32
      %s46 = sphi 0, %s48
      %s49 = sphi 0, %s46
      %s50 = sphi 0, %s49
      %s66 = sphi 0, %s50
      %s74 = sphi 0, %s76
      %s77 = sphi 0, %s74
      %s78 = sphi 0, %s77
      %s94 = sphi 0, %s78
      %s102 = sphi 0, %s104
      %s105 = sphi 0, %s102
      %s106 = sphi 0, %s105
      %s122 = sphi 0, %s106
      %s128 = sphi 0, %s130
      %s131 = sphi 0, %s128
      %s132 = sphi 0, %s131
      %s148 = sphi 0, %s132
      %s156 = sphi 0, %s158
      %s159 = sphi 0, %s156
      %s160 = sphi 0, %s159
      %s176 = sphi 0, %s160
    $region4: #{transformer_xl_decoder_layer.10} parent=1 // loop_header_branch
      %25 = sbr.rel (%p23) target = $region8
    $region5: #{transformer_xl_decoder_layer.10} parent=1 // loop_body
      %s27 = ssub.s32 %s22, 1
      %s28 = ssub.s32 %s22, 2
      %s35 = sadd.s32 1, %s30
      %p36 = scmp.ge.s32.totalorder %s35, 4
      %s37 = scalar_select %p36, 0, %s35
      %s38 = sadd.s32 1, %s29
      %s39 = scalar_select %p36, %s38, %s29
      %p40 = scmp.ge.s32.totalorder %s39, 2
      %s41 = scalar_select %p40, 0, %s39
      %s42 = ssub.s32 %s29, %s41
      %s43 = ssub.s32 %s30, %s37
      %s44 = sor.u32 %s42, %s43
      %p45 = scmp.eq.s32.totalorder %s44, 0
      %s47 = sadd.s32 %s46, 1
      %s48 = scalar_select %p45, %s46, %s47
      %p51 = pneg %p45
      %p52 = scmp.eq.s32.totalorder %s22, 7
      %p53 = por %p51, %p52
      %p54 = scmp.ne.s32.totalorder %s46, %s49
      %p55 = scmp.eq.s32.totalorder %s22, 0
      %p56 = por %p54, %p55
      %p57 = scmp.ne.s32.totalorder %s46, %s49
      %p58 = scmp.eq.s32.totalorder %s27, 7
      %p59 = por %p57, %p58
      %p60 = scmp.ne.s32.totalorder %s49, %s50
      %p61 = scmp.eq.s32.totalorder %s27, 0
      %p62 = por %p60, %p61
      %p63 = scmp.ne.s32.totalorder %s49, %s50
      %p64 = scmp.eq.s32.totalorder %s28, 7
      %p65 = por %p63, %p64
      %p67 = scmp.ne.s32.totalorder %s50, %s66
      %p68 = scmp.eq.s32.totalorder %s28, 0
      %p69 = por %p67, %p68
      %s70 = ssub.s32 %s29, %s41
      %s71 = ssub.s32 %s30, %s37
      %s72 = sor.u32 %s70, %s71
      %p73 = scmp.eq.s32.totalorder %s72, 0
      %s75 = sadd.s32 %s74, 1
      %s76 = scalar_select %p73, %s74, %s75
      %p79 = pneg %p73
      %p80 = scmp.eq.s32.totalorder %s22, 7
      %p81 = por %p79, %p80
      %p82 = scmp.ne.s32.totalorder %s74, %s77
      %p83 = scmp.eq.s32.totalorder %s22, 0
      %p84 = por %p82, %p83
      %p85 = scmp.ne.s32.totalorder %s74, %s77
      %p86 = scmp.eq.s32.totalorder %s27, 7
      %p87 = por %p85, %p86
      %p88 = scmp.ne.s32.totalorder %s77, %s78
      %p89 = scmp.eq.s32.totalorder %s27, 0
      %p90 = por %p88, %p89
      %p91 = scmp.ne.s32.totalorder %s77, %s78
      %p92 = scmp.eq.s32.totalorder %s28, 7
      %p93 = por %p91, %p92
      %p95 = scmp.ne.s32.totalorder %s78, %s94
      %p96 = scmp.eq.s32.totalorder %s28, 0
      %p97 = por %p95, %p96
      %s98 = ssub.s32 %s29, %s41
      %s99 = ssub.s32 %s30, %s37
      %s100 = sor.u32 %s98, %s99
      %p101 = scmp.eq.s32.totalorder %s100, 0
      %s103 = sadd.s32 %s102, 1
      %s104 = scalar_select %p101, %s102, %s103
      %p107 = pneg %p101
      %p108 = scmp.eq.s32.totalorder %s22, 7
      %p109 = por %p107, %p108
      %p110 = scmp.ne.s32.totalorder %s102, %s105
      %p111 = scmp.eq.s32.totalorder %s22, 0
      %p112 = por %p110, %p111
      %p113 = scmp.ne.s32.totalorder %s102, %s105
      %p114 = scmp.eq.s32.totalorder %s27, 7
      %p115 = por %p113, %p114
      %p116 = scmp.ne.s32.totalorder %s105, %s106
      %p117 = scmp.eq.s32.totalorder %s27, 0
      %p118 = por %p116, %p117
      %p119 = scmp.ne.s32.totalorder %s105, %s106
      %p120 = scmp.eq.s32.totalorder %s28, 7
      %p121 = por %p119, %p120
      %p123 = scmp.ne.s32.totalorder %s106, %s122
      %p124 = scmp.eq.s32.totalorder %s28, 0
      %p125 = por %p123, %p124
      %s126 = ssub.s32 %s30, %s37
      %p127 = scmp.eq.s32.totalorder %s126, 0
      %s129 = sadd.s32 %s128, 1
      %s130 = scalar_select %p127, %s128, %s129
      %p133 = pneg %p127
      %p134 = scmp.eq.s32.totalorder %s22, 7
      %p135 = por %p133, %p134
      %p136 = scmp.ne.s32.totalorder %s128, %s131
      %p137 = scmp.eq.s32.totalorder %s22, 0
      %p138 = por %p136, %p137
      %p139 = scmp.ne.s32.totalorder %s128, %s131
      %p140 = scmp.eq.s32.totalorder %s27, 7
      %p141 = por %p139, %p140
      %p142 = scmp.ne.s32.totalorder %s131, %s132
      %p143 = scmp.eq.s32.totalorder %s27, 0
      %p144 = por %p142, %p143
      %p145 = scmp.ne.s32.totalorder %s131, %s132
      %p146 = scmp.eq.s32.totalorder %s28, 7
      %p147 = por %p145, %p146
      %p149 = scmp.ne.s32.totalorder %s132, %s148
      %p150 = scmp.eq.s32.totalorder %s28, 0
      %p151 = por %p149, %p150
      %s152 = ssub.s32 %s29, %s41
      %s153 = ssub.s32 %s30, %s37
      %s154 = sor.u32 %s152, %s153
      %p155 = scmp.eq.s32.totalorder %s154, 0
      %s157 = sadd.s32 %s156, 1
      %s158 = scalar_select %p155, %s156, %s157
      %p161 = pneg %p155
      %p162 = scmp.eq.s32.totalorder %s22, 7
      %p163 = por %p161, %p162
      %p164 = scmp.ne.s32.totalorder %s156, %s159
      %p165 = scmp.eq.s32.totalorder %s22, 0
      %p166 = por %p164, %p165
      %p167 = scmp.ne.s32.totalorder %s156, %s159
      %p168 = scmp.eq.s32.totalorder %s27, 7
      %p169 = por %p167, %p168
      %p170 = scmp.ne.s32.totalorder %s159, %s160
      %p171 = scmp.eq.s32.totalorder %s27, 0
      %p172 = por %p170, %p171
      %p173 = scmp.ne.s32.totalorder %s159, %s160
      %p174 = scmp.eq.s32.totalorder %s28, 7
      %p175 = por %p173, %p174
      %p177 = scmp.ne.s32.totalorder %s160, %s176
      %p178 = scmp.eq.s32.totalorder %s28, 0
      %p179 = por %p177, %p178
      %p180 = scmp.le.s32.totalorder 1, %s22
      %p181 = scmp.lt.s32.totalorder %s22, 9
      %p182 = pnand %p180, %p181
      %p183 = pneg %p182
      // Predicated region
      $region9: #{transformer_xl_decoder_layer.10} parent=5 // pred_check
        _
      $region10: #{transformer_xl_decoder_layer.10} parent=5 // pred_check_branch
        %185 = sbr.rel (%p182) target = $region12
      $region11: #{transformer_xl_decoder_layer.10} parent=5 // pred_region
        %s186 = ssub.s32 %s22, 1
      $region12: #{transformer_xl_decoder_layer.10} parent=5 // pred_fallthru
        _
      %p187 = scmp.lt.s32.totalorder %s22, 8
      // Predicated region
      $region13: #{transformer_xl_decoder_layer.10} parent=5 // pred_check
        %p188 = pneg %p187
      $region14: #{transformer_xl_decoder_layer.10} parent=5 // pred_check_branch
        %190 = sbr.rel (%p188) target = $region16
      $region15: #{transformer_xl_decoder_layer.10} parent=5 // pred_region
        // Predicated region
        $region17: #{transformer_xl_decoder_layer.10} parent=15 // pred_check
          %p191 = pneg %p56
        $region18: #{transformer_xl_decoder_layer.10} parent=15 // pred_check_branch
          %193 = sbr.rel (%p191) target = $region20
        $region19: #{transformer_xl_decoder_layer.10} parent=15 // pred_region
          %s194 = sand.u32 %s46, 1
          %s195 = scalar_lea.sflag [#allocation3], %s194
          %s196 = sand.u32 %s46, 1
          %s197 = smul.addr %s196, 4
          %s198 = scalar_lea.vmem [#allocation2], %s197
          %s200 = ssub.s32 64, 64
          %201 = vsyncadd %s195, %s200
          %s202 = smul.addr %s29, 4
          %s203 = sadd.s32 %s30, %s202
          %s204 = smul.addr %s203, 64
          %s205 = scalar_lea.hbm %s0, %s204
          %s207 = sshll.u32 %s198, 4
          %s208 = int_to_ptr.vmem [resolvable:$true] %s207
          %210 = dma.hbm_to_vmem [thread:$0]  %s205, 64, %s208, %s195
        $region20: #{transformer_xl_decoder_layer.10} parent=15 // pred_fallthru
          _
        // Predicated region
        $region21: #{transformer_xl_decoder_layer.10} parent=15 // pred_check
          %p211 = pneg %p84
        $region22: #{transformer_xl_decoder_layer.10} parent=15 // pred_check_branch
          %213 = sbr.rel (%p211) target = $region24
        $region23: #{transformer_xl_decoder_layer.10} parent=15 // pred_region
          %s214 = sand.u32 %s22, 1
          %s215 = scalar_lea.sflag [#allocation6], %s214
          %s216 = sand.u32 %s74, 1
          %s217 = smul.addr %s216, 4
          %s218 = scalar_lea.vmem [#allocation5], %s217
          %s220 = ssub.s32 64, 64
          %221 = vsyncadd %s215, %s220
          %s222 = smul.addr %s29, 4
          %s223 = sadd.s32 %s30, %s222
          %s224 = smul.addr %s223, 64
          %s225 = scalar_lea.hbm %s1, %s224
          %s227 = sshll.u32 %s218, 4
          %s228 = int_to_ptr.vmem [resolvable:$true] %s227
          %230 = dma.hbm_to_vmem [thread:$0]  %s225, 64, %s228, %s215
        $region24: #{transformer_xl_decoder_layer.10} parent=15 // pred_fallthru
          _
        // Predicated region
        $region25: #{transformer_xl_decoder_layer.10} parent=15 // pred_check
          %p231 = pneg %p112
        $region26: #{transformer_xl_decoder_layer.10} parent=15 // pred_check_branch
          %233 = sbr.rel (%p231) target = $region28
        $region27: #{transformer_xl_decoder_layer.10} parent=15 // pred_region
          %s234 = sand.u32 %s22, 1
          %s235 = scalar_lea.sflag [#allocation6], %s234
          %s236 = sand.u32 %s102, 1
          %s237 = smul.addr %s236, 4
          %s238 = scalar_lea.vmem [#allocation7], %s237
          %s240 = ssub.s32 64, 64
          %241 = vsyncadd %s235, %s240
          %s242 = smul.addr %s29, 4
          %s243 = sadd.s32 %s30, %s242
          %s244 = smul.addr %s243, 64
          %s245 = scalar_lea.hbm %s2, %s244
          %s247 = sshll.u32 %s238, 4
          %s248 = int_to_ptr.vmem [resolvable:$true] %s247
          %250 = dma.hbm_to_vmem [thread:$0]  %s245, 64, %s248, %s235
        $region28: #{transformer_xl_decoder_layer.10} parent=15 // pred_fallthru
          _
        // Predicated region
        $region29: #{transformer_xl_decoder_layer.10} parent=15 // pred_check
          %p251 = pneg %p138
        $region30: #{transformer_xl_decoder_layer.10} parent=15 // pred_check_branch
          %253 = sbr.rel (%p251) target = $region32
        $region31: #{transformer_xl_decoder_layer.10} parent=15 // pred_region
          %s254 = sand.u32 %s128, 1
          %s255 = scalar_lea.sflag [#allocation9], %s254
          %s256 = sand.u32 %s128, 1
          %s257 = smul.addr %s256, 8
          %s258 = scalar_lea.vmem [#allocation8], %s257
          %s260 = ssub.s32 128, 128
          %261 = vsyncadd %s255, %s260
          %s262 = smul.addr %s30, 2
          %s263 = smul.addr %s262, 64
          %s264 = scalar_lea.hbm %s3, %s263
          %s265 = sshll.u32 %s258, 4
          %s266 = int_to_ptr.vmem [resolvable:$true] %s265
          %271 = dma.hbm_to_vmem [thread:$0]  %s264, 128, %s266, %s255, 64, 64, 4
        $region32: #{transformer_xl_decoder_layer.10} parent=15 // pred_fallthru
          _
      $region16: #{transformer_xl_decoder_layer.10} parent=5 // pred_fallthru
        _
      %p272 = scmp.le.s32.totalorder 1, %s22
      %p273 = scmp.lt.s32.totalorder %s22, 9
      %p274 = pnand %p272, %p273
      %p275 = pneg %p274
      // Predicated region
      $region33: #{transformer_xl_decoder_layer.10} parent=5 // pred_check
        _
      $region34: #{transformer_xl_decoder_layer.10} parent=5 // pred_check_branch
        %277 = sbr.rel (%p274) target = $region36
      $region35: #{transformer_xl_decoder_layer.10} parent=5 // pred_region
        %s278 = ssub.s32 %s22, 1
        %s279 = sand.u32 %s49, 1
        %s280 = scalar_lea.sflag [#allocation3], %s279
        %s281 = sand.u32 %s49, 1
        %s282 = smul.addr %s281, 4
        %s283 = scalar_lea.vmem [#allocation2], %s282
        // Predicated region
        $region37: #{transformer_xl_decoder_layer.10} parent=35 // pred_check
          %p284 = pneg %p62
        $region38: #{transformer_xl_decoder_layer.10} parent=35 // pred_check_branch
          %286 = sbr.rel (%p284) target = $region40
        $region39: #{transformer_xl_decoder_layer.10} parent=35 // pred_region
          %287 = dma.done %s280, 64
        $region40: #{transformer_xl_decoder_layer.10} parent=35 // pred_fallthru
          _
        %s288 = sand.u32 %s27, 1
        %s289 = scalar_lea.sflag [#allocation6], %s288
        %s290 = sand.u32 %s77, 1
        %s291 = smul.addr %s290, 4
        %s292 = scalar_lea.vmem [#allocation5], %s291
        // Predicated region
        $region41: #{transformer_xl_decoder_layer.10} parent=35 // pred_check
          %p293 = pneg %p90
        $region42: #{transformer_xl_decoder_layer.10} parent=35 // pred_check_branch
          %295 = sbr.rel (%p293) target = $region44
        $region43: #{transformer_xl_decoder_layer.10} parent=35 // pred_region
          %296 = dma.done %s289, 64
        $region44: #{transformer_xl_decoder_layer.10} parent=35 // pred_fallthru
          _
        %s297 = sand.u32 %s27, 1
        %s298 = scalar_lea.sflag [#allocation6], %s297
        %s299 = sand.u32 %s105, 1
        %s300 = smul.addr %s299, 4
        %s301 = scalar_lea.vmem [#allocation7], %s300
        // Predicated region
        $region45: #{transformer_xl_decoder_layer.10} parent=35 // pred_check
          %p302 = pneg %p118
        $region46: #{transformer_xl_decoder_layer.10} parent=35 // pred_check_branch
          %304 = sbr.rel (%p302) target = $region48
        $region47: #{transformer_xl_decoder_layer.10} parent=35 // pred_region
          %305 = dma.done %s298, 64
        $region48: #{transformer_xl_decoder_layer.10} parent=35 // pred_fallthru
          _
        %s306 = sand.u32 %s131, 1
        %s307 = scalar_lea.sflag [#allocation9], %s306
        %s308 = sand.u32 %s131, 1
        %s309 = smul.addr %s308, 8
        %s310 = scalar_lea.vmem [#allocation8], %s309
        // Predicated region
        $region49: #{transformer_xl_decoder_layer.10} parent=35 // pred_check
          %p311 = pneg %p144
        $region50: #{transformer_xl_decoder_layer.10} parent=35 // pred_check_branch
          %313 = sbr.rel (%p311) target = $region52
        $region51: #{transformer_xl_decoder_layer.10} parent=35 // pred_region
          %314 = dma.done %s307, 128
        $region52: #{transformer_xl_decoder_layer.10} parent=35 // pred_fallthru
          _
        %s315 = sand.u32 %s49, 1
        %s316 = scalar_lea.sflag [#allocation3], %s315
        %s317 = sand.u32 %s49, 1
        %s318 = smul.addr %s317, 4
        %s319 = scalar_lea.vmem [#allocation2], %s318
        %p320 = pneg %p62
        %p321 = pneg %p59
        %s322 = sand.u32 %s27, 1
        %s323 = scalar_lea.sflag [#allocation6], %s322
        %s324 = sand.u32 %s77, 1
        %s325 = smul.addr %s324, 4
        %s326 = scalar_lea.vmem [#allocation5], %s325
        %p327 = pneg %p90
        %p328 = pneg %p87
        %s329 = sand.u32 %s27, 1
        %s330 = scalar_lea.sflag [#allocation6], %s329
        %s331 = sand.u32 %s105, 1
        %s332 = smul.addr %s331, 4
        %s333 = scalar_lea.vmem [#allocation7], %s332
        %p334 = pneg %p118
        %p335 = pneg %p115
        %s336 = sand.u32 %s131, 1
        %s337 = scalar_lea.sflag [#allocation9], %s336
        %s338 = sand.u32 %s131, 1
        %s339 = smul.addr %s338, 8
        %s340 = scalar_lea.vmem [#allocation8], %s339
        %p341 = pneg %p144
        %p342 = pneg %p141
        %p343 = pneg %p172
        %p344 = pneg %p169
        %s345 = sand.u32 %s159, 1
        %s346 = scalar_lea.sflag [#allocation4], %s345
        %s347 = sand.u32 %s159, 1
        %s348 = smul.addr %s347, 4
        %s349 = scalar_lea.vmem [#allocation10], %s348
        %v351 = vld [vmem:[%s283] sm:$0xf]
        %v352 = vld [vmem:[%s292] sm:$0xf]
        %v353 = vld [vmem:[%s301] sm:$0xf]
        %v354 = vld [vmem:[%s310] sm:$0xf]
        %v355 = vld [vmem:[%s310 + $0x4] sm:$0x1]
        %v358 = vunpack.c.l.b16 %v354
        %v359 = vunpack.c.l.b16 %v355
        %v360 = vpack.c.b16 %v359, %v358
        %vm361 = vcmask 64512
        %v363 = vsel %vm361, %v351, 0
        %v366 = vsel %vm361, %v360, 0
        %368 = vmatprep.subr.bf16.mxu0 0
        %369 = vmatpush1.bf16.xpose.msra.mxu0 %v366
        %370 = vmatprep.subr.bf16.mxu0 0
        %371 = vmatpush1.bf16.xpose.msra.mxu0 0
        %372 = vmatprep.subr.bf16.mxu0 0
        %373 = vmatpush1.bf16.xpose.msra.mxu0 0
        %374 = vmatprep.subr.bf16.mxu0 0
        %375 = vmatpush1.bf16.xpose.msra.mxu0 0
        %376 = vmatprep.subr.bf16.mxu0 0
        %377 = vmatpush1.bf16.xpose.msra.mxu0 0
        %378 = vmatprep.subr.bf16.mxu0 0
        %379 = vmatpush1.bf16.xpose.msra.mxu0 0
        %380 = vmatprep.subr.bf16.mxu0 0
        %381 = vmatpush1.bf16.xpose.msra.mxu0 0
        %382 = vmatprep.subr.bf16.mxu0 0
        %383 = vmatpush1.bf16.xpose.msra.mxu0 0
        %384 = vmatprep.subr.bf16.mxu0 0
        %385 = vmatpush1.bf16.xpose.msra.mxu0 0
        %386 = vmatprep.subr.bf16.mxu0 0
        %387 = vmatpush1.bf16.xpose.msra.mxu0 0
        %388 = vmatprep.subr.bf16.mxu0 0
        %389 = vmatpush1.bf16.xpose.msra.mxu0 0
        %390 = vmatprep.subr.bf16.mxu0 0
        %391 = vmatpush1.bf16.xpose.msra.mxu0 0
        %392 = vmatprep.subr.bf16.mxu0 0
        %393 = vmatpush1.bf16.xpose.msra.mxu0 0
        %394 = vmatprep.subr.bf16.mxu0 0
        %395 = vmatpush1.bf16.xpose.msra.mxu0 0
        %396 = vmatprep.subr.bf16.mxu0 0
        %397 = vmatpush1.bf16.xpose.msra.mxu0 0
        %398 = vmatprep.subr.bf16.mxu0 0
        %399 = vmatpush1.bf16.xpose.msra.mxu0 0
        %400 = vmatprep.mubr.bf16.mxu0 0
        %401 = vmatmul.mubr.bf16.gmra.mrb[0].mxu0 %v363
        %v402 = vpop.f32.mrb[0].mxu0
        %v403 = vadd.f32 0.0, %v402
        %v404 = vpop.f32.mrb[0].mxu0
        %v405 = vpop.f32.mrb[0].mxu0
        %v406 = vpop.f32.mrb[0].mxu0
        %407 = vdwg.mxu0
        %v409 = vrot.slane %v403, 1
        %vm411 = vcmask 1046528
        %v412 = vsel %vm411, %v409, %v403
        %414 = vrot.lane.b32.xlu0 %v412, 9
        %v415 = vpop.permute.xlu0 %414
        %vm417 = vcmask 72704
        %v418 = vsel %vm417, %v403, %v415
        %v419 = vlaneseq
        %v420 = vshrl.u32 %v419, 7
        %v421 = vsub.s32 8, %v420
        %423 = vrot.lane.b32.xlu0 %v418, 127
        %v424 = vpop.permute.xlu0 %423
        %426 = vrot.lane.b32.xlu0 %v418, 17
        %v427 = vpop.permute.xlu0 %426
        %vm429 = vcmask 138240
        %v430 = vsel %vm429, %v424, %v427
        %v431 = vand.u32 %v421, 1
        %vm432 = vcmp.ne.s32.totalorder %v431, 0
        %v433 = vsel %vm432, %v430, %v418
        %435 = vrot.lane.b32.xlu0 %v433, 126
        %v436 = vpop.permute.xlu0 %435
        %438 = vrot.lane.b32.xlu0 %v433, 16
        %v439 = vpop.permute.xlu0 %438
        %vm441 = vcmask 130048
        %v442 = vsel %vm441, %v436, %v439
        %v443 = vand.u32 %v421, 2
        %vm444 = vcmp.ne.s32.totalorder %v443, 0
        %v445 = vsel %vm444, %v442, %v433
        %447 = vrot.lane.b32.xlu0 %v445, 124
        %v448 = vpop.permute.xlu0 %447
        %450 = vrot.lane.b32.xlu0 %v445, 14
        %v451 = vpop.permute.xlu0 %450
        %vm453 = vcmask 113664
        %v454 = vsel %vm453, %v448, %v451
        %v455 = vand.u32 %v421, 4
        %vm456 = vcmp.ne.s32.totalorder %v455, 0
        %v457 = vsel %vm456, %v454, %v445
        %459 = vrot.lane.b32.xlu0 %v457, 120
        %v460 = vpop.permute.xlu0 %459
        %462 = vrot.lane.b32.xlu0 %v457, 10
        %v463 = vpop.permute.xlu0 %462
        %vm465 = vcmask 80896
        %v466 = vsel %vm465, %v460, %v463
        %v467 = vand.u32 %v421, 8
        %vm468 = vcmp.ne.s32.totalorder %v467, 0
        %v469 = vsel %vm468, %v466, %v457
        %v471 = vsel %vm361, %v352, 0
        %473 = vmatprep.subr.bf16.mxu0 0
        %474 = vmatpush1.bf16.xpose.msra.mxu0 %v471
        %475 = vmatprep.subr.bf16.mxu0 0
        %476 = vmatpush1.bf16.xpose.msra.mxu0 0
        %477 = vmatprep.subr.bf16.mxu0 0
        %478 = vmatpush1.bf16.xpose.msra.mxu0 0
        %479 = vmatprep.subr.bf16.mxu0 0
        %480 = vmatpush1.bf16.xpose.msra.mxu0 0
        %481 = vmatprep.subr.bf16.mxu0 0
        %482 = vmatpush1.bf16.xpose.msra.mxu0 0
        %483 = vmatprep.subr.bf16.mxu0 0
        %484 = vmatpush1.bf16.xpose.msra.mxu0 0
        %485 = vmatprep.subr.bf16.mxu0 0
        %486 = vmatpush1.bf16.xpose.msra.mxu0 0
        %487 = vmatprep.subr.bf16.mxu0 0
        %488 = vmatpush1.bf16.xpose.msra.mxu0 0
        %489 = vmatprep.subr.bf16.mxu0 0
        %490 = vmatpush1.bf16.xpose.msra.mxu0 0
        %491 = vmatprep.subr.bf16.mxu0 0
        %492 = vmatpush1.bf16.xpose.msra.mxu0 0
        %493 = vmatprep.subr.bf16.mxu0 0
        %494 = vmatpush1.bf16.xpose.msra.mxu0 0
        %495 = vmatprep.subr.bf16.mxu0 0
        %496 = vmatpush1.bf16.xpose.msra.mxu0 0
        %497 = vmatprep.subr.bf16.mxu0 0
        %498 = vmatpush1.bf16.xpose.msra.mxu0 0
        %499 = vmatprep.subr.bf16.mxu0 0
        %500 = vmatpush1.bf16.xpose.msra.mxu0 0
        %501 = vmatprep.subr.bf16.mxu0 0
        %502 = vmatpush1.bf16.xpose.msra.mxu0 0
        %503 = vmatprep.subr.bf16.mxu0 0
        %504 = vmatpush1.bf16.xpose.msra.mxu0 0
        %505 = vmatprep.mubr.bf16.mxu0 0
        %506 = vmatmul.mubr.bf16.gmra.mrb[0].mxu0 %v363
        %v507 = vpop.f32.mrb[0].mxu0
        %v508 = vadd.f32 %v469, %v507
        %v509 = vpop.f32.mrb[0].mxu0
        %v510 = vpop.f32.mrb[0].mxu0
        %v511 = vpop.f32.mrb[0].mxu0
        %512 = vdwg.mxu0
        %v513 = vmul.f32 %v508, 0.35355338
        %v514 = vsel %vm361, %v513, -inf
        %515 = vmax.xlane.f32.xlu0 %v514
        %v516 = vpop.xlane.xlu0 %515
        %v517 = vsub.f32 %v513, %v516
        %v518 = vmul.f32 %v517, 1.442695
        %v519 = vpow.pop %v518
        %v520 = vsel %vm361, %v519, 0.0
        %521 = vadd.xlane.f32.xlu0 %v520
        %v522 = vpop.xlane.xlu0 %521
        %v523 = vrcp.pop %v522
        %v524 = vmul.f32 %v519, %v523
        %v525 = vpack.c.bf16 %v524, %v524
        %v527 = vsel %vm361, %v525, 0
        %vm529 = vcmask 1043456
        %v531 = vsel %vm529, %v353, 0
        %533 = vmatprep.subr.bf16.mxu0 0
        %534 = vmatpush1.bf16.msra.mxu0 %v531
        %535 = vmatprep.subr.bf16.mxu0 0
        %536 = vmatpush1.bf16.msra.mxu0 0
        %537 = vmatprep.subr.bf16.mxu0 0
        %538 = vmatpush1.bf16.msra.mxu0 0
        %539 = vmatprep.subr.bf16.mxu0 0
        %540 = vmatpush1.bf16.msra.mxu0 0
        %541 = vmatprep.subr.bf16.mxu0 0
        %542 = vmatpush1.bf16.msra.mxu0 0
        %543 = vmatprep.subr.bf16.mxu0 0
        %544 = vmatpush1.bf16.msra.mxu0 0
        %545 = vmatprep.subr.bf16.mxu0 0
        %546 = vmatpush1.bf16.msra.mxu0 0
        %547 = vmatprep.subr.bf16.mxu0 0
        %548 = vmatpush1.bf16.msra.mxu0 0
        %549 = vmatprep.subr.bf16.mxu0 0
        %550 = vmatpush1.bf16.msra.mxu0 0
        %551 = vmatprep.subr.bf16.mxu0 0
        %552 = vmatpush1.bf16.msra.mxu0 0
        %553 = vmatprep.subr.bf16.mxu0 0
        %554 = vmatpush1.bf16.msra.mxu0 0
        %555 = vmatprep.subr.bf16.mxu0 0
        %556 = vmatpush1.bf16.msra.mxu0 0
        %557 = vmatprep.subr.bf16.mxu0 0
        %558 = vmatpush1.bf16.msra.mxu0 0
        %559 = vmatprep.subr.bf16.mxu0 0
        %560 = vmatpush1.bf16.msra.mxu0 0
        %561 = vmatprep.subr.bf16.mxu0 0
        %562 = vmatpush1.bf16.msra.mxu0 0
        %563 = vmatprep.subr.bf16.mxu0 0
        %564 = vmatpush1.bf16.msra.mxu0 0
        %565 = vmatprep.mubr.bf16.mxu0 0
        %566 = vmatmul.mubr.bf16.gmra.mrb[0].mxu0 %v527
        %v567 = vpop.f32.mrb[0].mxu0
        %v568 = vadd.f32 0.0, %v567
        %v569 = vpop.f32.mrb[0].mxu0
        %v570 = vpop.f32.mrb[0].mxu0
        %v571 = vpop.f32.mrb[0].mxu0
        %572 = vdwg.mxu0
        %v573 = vpack.c.bf16 %v568, %v568
        %vm574 = vcmask 60416
        %575 = vst.msk [vmem:[%s349] sm:$0xf] %vm574, %v573
        %s576 = sand.u32 %s159, 1
        %s577 = scalar_lea.sflag [#allocation4], %s576
        %s578 = sand.u32 %s159, 1
        %s579 = smul.addr %s578, 4
        %s580 = scalar_lea.vmem [#allocation10], %s579
        // Predicated region
        $region53: #{transformer_xl_decoder_layer.10} parent=35 // pred_check
          %p581 = pneg %p169
        $region54: #{transformer_xl_decoder_layer.10} parent=35 // pred_check_branch
          %583 = sbr.rel (%p581) target = $region56
        $region55: #{transformer_xl_decoder_layer.10} parent=35 // pred_region
          %s585 = ssub.s32 64, 64
          %586 = vsyncadd %s577, %s585
          %s587 = smul.addr %s31, 4
          %s588 = sadd.s32 %s32, %s587
          %s589 = smul.addr %s588, 64
          %s590 = scalar_lea.hbm %s4, %s589
          %s592 = sshll.u32 %s580, 4
          %s593 = int_to_ptr.vmem [resolvable:$true] %s592
          %595 = dma.vmem_to_hbm [thread:$0]  %s593, 64, %s590, %s577
        $region56: #{transformer_xl_decoder_layer.10} parent=35 // pred_fallthru
          _
      $region36: #{transformer_xl_decoder_layer.10} parent=5 // pred_fallthru
        _
      %p596 = scmp.le.s32.totalorder 2, %s22
      // Predicated region
      $region57: #{transformer_xl_decoder_layer.10} parent=5 // pred_check
        %p597 = pneg %p596
      $region58: #{transformer_xl_decoder_layer.10} parent=5 // pred_check_branch
        %599 = sbr.rel (%p597) target = $region60
      $region59: #{transformer_xl_decoder_layer.10} parent=5 // pred_region
        %s600 = ssub.s32 %s22, 2
        // Predicated region
        $region61: #{transformer_xl_decoder_layer.10} parent=59 // pred_check
          %p601 = pneg %p175
        $region62: #{transformer_xl_decoder_layer.10} parent=59 // pred_check_branch
          %603 = sbr.rel (%p601) target = $region64
        $region63: #{transformer_xl_decoder_layer.10} parent=59 // pred_region
          %s604 = sand.u32 %s160, 1
          %s605 = scalar_lea.sflag [#allocation4], %s604
          %s606 = sand.u32 %s160, 1
          %s607 = smul.addr %s606, 4
          %s608 = scalar_lea.vmem [#allocation10], %s607
          %609 = dma.done %s605, 64
        $region64: #{transformer_xl_decoder_layer.10} parent=59 // pred_fallthru
          _
      $region60: #{transformer_xl_decoder_layer.10} parent=5 // pred_fallthru
        _
    $region6: #{transformer_xl_decoder_layer.10} parent=1 // loop_footer
      %s26 = sadd.s32 1, %s22
    $region7: #{transformer_xl_decoder_layer.10} parent=1 // loop_footer_branch
      %21 = sbr.rel target = $region3
    $region8: #{transformer_xl_decoder_layer.10} parent=1 // loop_exit
      _
    %610 = vsyncpa [#allocation3], 1
    %s611 = scalar_lea.sflag [#allocation3], 1
    %612 = vsyncpa %s611, 1
    %613 = vsyncpa [#allocation6], 1
    %s614 = scalar_lea.sflag [#allocation6], 1
    %615 = vsyncpa %s614, 1
    %616 = vsyncpa [#allocation9], 1
    %s617 = scalar_lea.sflag [#allocation9], 1
    %618 = vsyncpa %s617, 1
    %619 = vsyncpa [#allocation4], 1
    %s620 = scalar_lea.sflag [#allocation4], 1
    %621 = vsyncpa %s620, 1

// kernel: transformer_xl_decoder_layer.11
$region0: #{transformer_xl_decoder_layer.11}
  #allocation0 [shape = 'u32[]', space=smem, size = 0x4, offset = 0x4, fixed_abs, tag = 'smem constant byte address 0x4 - core index']
  #allocation1 [shape = 'u32[144,128]{1,0:T(1,128)}', space=vmem, size = 0x12000, scoped, tag = 'internal scratch']
  #allocation2 [shape = 'f32[16,32]{1,0:T(8,128)}', space=vmem, size = 0x2000, scoped, tag = 'scratch operand']
  %s0 = inlined_call_operand.vmem [shape: bf16[16,32], index: 0, kind: input, shape index: {}]
  %s1 = inlined_call_operand.vmem [shape: bf16[32,32], index: 1, kind: input, shape index: {}]
  %s2 = inlined_call_operand.vmem [shape: f32[1,32], index: 2, kind: input, shape index: {}]
  %s3 = inlined_call_operand.vmem [shape: bf16[16,32], index: 3, kind: output, shape index: {}]
  %s4 = sld [smem:[#allocation0]]
  $region30: #{transformer_xl_decoder_layer.11} parent=0
    _
  %s6 = ssub.s32 1, %s4
  %s7 = scalar_select 0, %s6, %s4
  // Predicated region
  $region2: #{transformer_xl_decoder_layer.11} parent=0 // pred_check
    _
  $region3: #{transformer_xl_decoder_layer.11} parent=0 // pred_check_branch
    %9 = sbr.rel (0) target = $region5
  $region4: #{transformer_xl_decoder_layer.11} parent=0 // pred_region
    _
  $region5: #{transformer_xl_decoder_layer.11} parent=0 // pred_fallthru
    _
  // Predicated region
  $region6: #{transformer_xl_decoder_layer.11} parent=0 // pred_check
    _
  $region7: #{transformer_xl_decoder_layer.11} parent=0 // pred_check_branch
    %11 = sbr.rel (0) target = $region9
  $region8: #{transformer_xl_decoder_layer.11} parent=0 // pred_region
    _
  $region9: #{transformer_xl_decoder_layer.11} parent=0 // pred_fallthru
    _
  // Predicated region
  $region10: #{transformer_xl_decoder_layer.11} parent=0 // pred_check
    _
  $region11: #{transformer_xl_decoder_layer.11} parent=0 // pred_check_branch
    %13 = sbr.rel (0) target = $region13
  $region12: #{transformer_xl_decoder_layer.11} parent=0 // pred_region
    _
  $region13: #{transformer_xl_decoder_layer.11} parent=0 // pred_fallthru
    _
  %p15 = scmp.eq.s32.totalorder 0, 0
  // Predicated region
  $region14: #{transformer_xl_decoder_layer.11} parent=0 // pred_check
    %p16 = pneg %p15
  $region15: #{transformer_xl_decoder_layer.11} parent=0 // pred_check_branch
    %18 = sbr.rel (%p16) target = $region17
  $region16: #{transformer_xl_decoder_layer.11} parent=0 // pred_region
    %vm19 = vcmask 261120
    %20 = vst.msk [vmem:[#allocation2] sm:$0xff] %vm19, 0.0
    %21 = vst.msk [vmem:[#allocation2 + $0x8] sm:$0xff] %vm19, 0.0
  $region17: #{transformer_xl_decoder_layer.11} parent=0 // pred_fallthru
    _
  %v22 = vld [vmem:[#allocation2] sm:$0xff]
  %v23 = vld [vmem:[#allocation2 + $0x8] sm:$0xff]
  %v24 = vld [vmem:[%s0] sm:$0xf]
  %v25 = vld [vmem:[%s0 + $0x4] sm:$0xf]
  %v26 = vld [vmem:[%s1] sm:$0xf]
  %v27 = vld [vmem:[%s1 + $0x4] sm:$0xf]
  %v28 = vld [vmem:[%s1 + $0x8] sm:$0xf]
  %v29 = vld [vmem:[%s1 + $0xc] sm:$0xf]
  %v32 = vunpack.c.l.b16 %v24
  %v33 = vunpack.c.l.b16 %v25
  %v34 = vpack.c.b16 %v33, %v32
  %v39 = vunpack.c.l.b16 %v26
  %v40 = vunpack.c.l.b16 %v27
  %v41 = vunpack.c.l.b16 %v28
  %v42 = vunpack.c.l.b16 %v29
  %v43 = vpack.c.b16 %v40, %v39
  %v44 = vpack.c.b16 %v42, %v41
  %vm47 = vcmask 261120
  %v49 = vsel %vm47, %v34, 0
  %51 = vmatprep.subr.bf16.mxu0 0
  %52 = vmatpush1.bf16.msra.mxu0 %v43
  %53 = vmatprep.subr.bf16.mxu0 0
  %54 = vmatpush1.bf16.msra.mxu0 %v44
  %55 = vmatprep.subr.bf16.mxu0 0
  %56 = vmatpush1.bf16.msra.mxu0 0
  %57 = vmatprep.subr.bf16.mxu0 0
  %58 = vmatpush1.bf16.msra.mxu0 0
  %59 = vmatprep.subr.bf16.mxu0 0
  %60 = vmatpush1.bf16.msra.mxu0 0
  %61 = vmatprep.subr.bf16.mxu0 0
  %62 = vmatpush1.bf16.msra.mxu0 0
  %63 = vmatprep.subr.bf16.mxu0 0
  %64 = vmatpush1.bf16.msra.mxu0 0
  %65 = vmatprep.subr.bf16.mxu0 0
  %66 = vmatpush1.bf16.msra.mxu0 0
  %67 = vmatprep.subr.bf16.mxu0 0
  %68 = vmatpush1.bf16.msra.mxu0 0
  %69 = vmatprep.subr.bf16.mxu0 0
  %70 = vmatpush1.bf16.msra.mxu0 0
  %71 = vmatprep.subr.bf16.mxu0 0
  %72 = vmatpush1.bf16.msra.mxu0 0
  %73 = vmatprep.subr.bf16.mxu0 0
  %74 = vmatpush1.bf16.msra.mxu0 0
  %75 = vmatprep.subr.bf16.mxu0 0
  %76 = vmatpush1.bf16.msra.mxu0 0
  %77 = vmatprep.subr.bf16.mxu0 0
  %78 = vmatpush1.bf16.msra.mxu0 0
  %79 = vmatprep.subr.bf16.mxu0 0
  %80 = vmatpush1.bf16.msra.mxu0 0
  %81 = vmatprep.subr.bf16.mxu0 0
  %82 = vmatpush1.bf16.msra.mxu0 0
  %83 = vmatprep.mubr.bf16.mxu0 0
  %84 = vmatmul.mubr.bf16.gmra.mrb[0].mxu0 %v49
  %v85 = vpop.f32.mrb[0].mxu0
  %v86 = vadd.f32 0.0, %v85
  %v87 = vpop.f32.mrb[0].mxu0
  %v88 = vpop.f32.mrb[0].mxu0
  %v89 = vadd.f32 0.0, %v88
  %v90 = vpop.f32.mrb[0].mxu0
  %91 = vdwg.mxu0
  %v92 = vadd.f32 %v22, %v86
  %v93 = vadd.f32 %v23, %v89
  %94 = vst.msk [vmem:[#allocation2] sm:$0xff] %vm47, %v92
  %95 = vst.msk [vmem:[#allocation2 + $0x8] sm:$0xff] %vm47, %v93
  // Predicated region
  $region18: #{transformer_xl_decoder_layer.11} parent=0 // pred_check
    %p96 = pneg %p15
  $region19: #{transformer_xl_decoder_layer.11} parent=0 // pred_check_branch
    %98 = sbr.rel (%p96) target = $region21
  $region20: #{transformer_xl_decoder_layer.11} parent=0 // pred_region
    %v99 = vld [vmem:[#allocation2] sm:$0xff]
    %v100 = vld [vmem:[#allocation2 + $0x8] sm:$0xff]
    %v101 = vld [vmem:[%s2] sm:$0x1]
    %v103 = vlaneseq
    %v104 = vshrl.u32 %v103, 7
    %v105 = vsub.s32 0, %v104
    %v106 = vrot.slane %v101, %v105
    %v108 = vadd.f32 %v99, %v106
    %v109 = vadd.f32 %v100, %v106
    %v110 = vpack.c.bf16 %v109, %v108
    %v112 = vunpack.c.l.b16 %v110
    %v113 = vunpack.c.h.b16 %v110
    %v114 = vpack.c.b16 %v112, %v112
    %v115 = vpack.c.b16 %v113, %v113
    %vm118 = vcmask 257024
    %119 = vst.msk [vmem:[%s3] sm:$0xf] %vm118, %v114
    %120 = vst.msk [vmem:[%s3 + $0x4] sm:$0xf] %vm118, %v115
  $region21: #{transformer_xl_decoder_layer.11} parent=0 // pred_fallthru
    _
  // Predicated region
  $region22: #{transformer_xl_decoder_layer.11} parent=0 // pred_check
    _
  $region23: #{transformer_xl_decoder_layer.11} parent=0 // pred_check_branch
    %122 = sbr.rel (0) target = $region25
  $region24: #{transformer_xl_decoder_layer.11} parent=0 // pred_region
    _
  $region25: #{transformer_xl_decoder_layer.11} parent=0 // pred_fallthru
    _
  // Predicated region
  $region26: #{transformer_xl_decoder_layer.11} parent=0 // pred_check
    _
  $region27: #{transformer_xl_decoder_layer.11} parent=0 // pred_check_branch
    %124 = sbr.rel (0) target = $region29
  $region28: #{transformer_xl_decoder_layer.11} parent=0 // pred_region
    _
  $region29: #{transformer_xl_decoder_layer.11} parent=0 // pred_fallthru
    _

// kernel: transformer_xl_decoder_layer.13
$region0: #{transformer_xl_decoder_layer.13}
  #allocation0 [shape = 'u32[]', space=smem, size = 0x4, offset = 0x4, fixed_abs, tag = 'smem constant byte address 0x4 - core index']
  #allocation1 [shape = 'u32[144,128]{1,0:T(1,128)}', space=vmem, size = 0x12000, scoped, tag = 'internal scratch']
  #allocation2 [shape = 'f32[16,64]{1,0:T(8,128)}', space=vmem, size = 0x2000, scoped, tag = 'scratch operand']
  %s0 = inlined_call_operand.vmem [shape: bf16[16,32], index: 0, kind: input, shape index: {}]
  %s1 = inlined_call_operand.vmem [shape: bf16[32,64], index: 1, kind: input, shape index: {}]
  %s2 = inlined_call_operand.vmem [shape: f32[1,64], index: 2, kind: input, shape index: {}]
  %s3 = inlined_call_operand.vmem [shape: bf16[16,64], index: 3, kind: output, shape index: {}]
  %s4 = sld [smem:[#allocation0]]
  $region30: #{transformer_xl_decoder_layer.13} parent=0
    _
  %s6 = ssub.s32 1, %s4
  %s7 = scalar_select 0, %s6, %s4
  // Predicated region
  $region2: #{transformer_xl_decoder_layer.13} parent=0 // pred_check
    _
  $region3: #{transformer_xl_decoder_layer.13} parent=0 // pred_check_branch
    %9 = sbr.rel (0) target = $region5
  $region4: #{transformer_xl_decoder_layer.13} parent=0 // pred_region
    _
  $region5: #{transformer_xl_decoder_layer.13} parent=0 // pred_fallthru
    _
  // Predicated region
  $region6: #{transformer_xl_decoder_layer.13} parent=0 // pred_check
    _
  $region7: #{transformer_xl_decoder_layer.13} parent=0 // pred_check_branch
    %11 = sbr.rel (0) target = $region9
  $region8: #{transformer_xl_decoder_layer.13} parent=0 // pred_region
    _
  $region9: #{transformer_xl_decoder_layer.13} parent=0 // pred_fallthru
    _
  // Predicated region
  $region10: #{transformer_xl_decoder_layer.13} parent=0 // pred_check
    _
  $region11: #{transformer_xl_decoder_layer.13} parent=0 // pred_check_branch
    %13 = sbr.rel (0) target = $region13
  $region12: #{transformer_xl_decoder_layer.13} parent=0 // pred_region
    _
  $region13: #{transformer_xl_decoder_layer.13} parent=0 // pred_fallthru
    _
  %p15 = scmp.eq.s32.totalorder 0, 0
  // Predicated region
  $region14: #{transformer_xl_decoder_layer.13} parent=0 // pred_check
    %p16 = pneg %p15
  $region15: #{transformer_xl_decoder_layer.13} parent=0 // pred_check_branch
    %18 = sbr.rel (%p16) target = $region17
  $region16: #{transformer_xl_decoder_layer.13} parent=0 // pred_region
    %vm19 = vcmask 523264
    %20 = vst.msk [vmem:[#allocation2] sm:$0xff] %vm19, 0.0
    %21 = vst.msk [vmem:[#allocation2 + $0x8] sm:$0xff] %vm19, 0.0
  $region17: #{transformer_xl_decoder_layer.13} parent=0 // pred_fallthru
    _
  %v22 = vld [vmem:[#allocation2] sm:$0xff]
  %v23 = vld [vmem:[#allocation2 + $0x8] sm:$0xff]
  %v24 = vld [vmem:[%s0] sm:$0xf]
  %v25 = vld [vmem:[%s0 + $0x4] sm:$0xf]
  %v26 = vld [vmem:[%s1] sm:$0xf]
  %v27 = vld [vmem:[%s1 + $0x4] sm:$0xf]
  %v28 = vld [vmem:[%s1 + $0x8] sm:$0xf]
  %v29 = vld [vmem:[%s1 + $0xc] sm:$0xf]
  %v32 = vunpack.c.l.b16 %v24
  %v33 = vunpack.c.l.b16 %v25
  %v34 = vpack.c.b16 %v33, %v32
  %v39 = vunpack.c.l.b16 %v26
  %v40 = vunpack.c.l.b16 %v27
  %v41 = vunpack.c.l.b16 %v28
  %v42 = vunpack.c.l.b16 %v29
  %v43 = vpack.c.b16 %v40, %v39
  %v44 = vpack.c.b16 %v42, %v41
  %vm47 = vcmask 261120
  %v49 = vsel %vm47, %v34, 0
  %51 = vmatprep.subr.bf16.mxu0 0
  %52 = vmatpush1.bf16.msra.mxu0 %v43
  %53 = vmatprep.subr.bf16.mxu0 0
  %54 = vmatpush1.bf16.msra.mxu0 %v44
  %55 = vmatprep.subr.bf16.mxu0 0
  %56 = vmatpush1.bf16.msra.mxu0 0
  %57 = vmatprep.subr.bf16.mxu0 0
  %58 = vmatpush1.bf16.msra.mxu0 0
  %59 = vmatprep.subr.bf16.mxu0 0
  %60 = vmatpush1.bf16.msra.mxu0 0
  %61 = vmatprep.subr.bf16.mxu0 0
  %62 = vmatpush1.bf16.msra.mxu0 0
  %63 = vmatprep.subr.bf16.mxu0 0
  %64 = vmatpush1.bf16.msra.mxu0 0
  %65 = vmatprep.subr.bf16.mxu0 0
  %66 = vmatpush1.bf16.msra.mxu0 0
  %67 = vmatprep.subr.bf16.mxu0 0
  %68 = vmatpush1.bf16.msra.mxu0 0
  %69 = vmatprep.subr.bf16.mxu0 0
  %70 = vmatpush1.bf16.msra.mxu0 0
  %71 = vmatprep.subr.bf16.mxu0 0
  %72 = vmatpush1.bf16.msra.mxu0 0
  %73 = vmatprep.subr.bf16.mxu0 0
  %74 = vmatpush1.bf16.msra.mxu0 0
  %75 = vmatprep.subr.bf16.mxu0 0
  %76 = vmatpush1.bf16.msra.mxu0 0
  %77 = vmatprep.subr.bf16.mxu0 0
  %78 = vmatpush1.bf16.msra.mxu0 0
  %79 = vmatprep.subr.bf16.mxu0 0
  %80 = vmatpush1.bf16.msra.mxu0 0
  %81 = vmatprep.subr.bf16.mxu0 0
  %82 = vmatpush1.bf16.msra.mxu0 0
  %83 = vmatprep.mubr.bf16.mxu0 0
  %84 = vmatmul.mubr.bf16.gmra.mrb[0].mxu0 %v49
  %v85 = vpop.f32.mrb[0].mxu0
  %v86 = vadd.f32 0.0, %v85
  %v87 = vpop.f32.mrb[0].mxu0
  %v88 = vpop.f32.mrb[0].mxu0
  %v89 = vadd.f32 0.0, %v88
  %v90 = vpop.f32.mrb[0].mxu0
  %91 = vdwg.mxu0
  %v92 = vadd.f32 %v22, %v86
  %v93 = vadd.f32 %v23, %v89
  %vm94 = vcmask 523264
  %95 = vst.msk [vmem:[#allocation2] sm:$0xff] %vm94, %v92
  %96 = vst.msk [vmem:[#allocation2 + $0x8] sm:$0xff] %vm94, %v93
  // Predicated region
  $region18: #{transformer_xl_decoder_layer.13} parent=0 // pred_check
    %p97 = pneg %p15
  $region19: #{transformer_xl_decoder_layer.13} parent=0 // pred_check_branch
    %99 = sbr.rel (%p97) target = $region21
  $region20: #{transformer_xl_decoder_layer.13} parent=0 // pred_region
    %v100 = vld [vmem:[#allocation2] sm:$0xff]
    %v101 = vld [vmem:[#allocation2 + $0x8] sm:$0xff]
    %v102 = vld [vmem:[%s2] sm:$0x1]
    %v104 = vlaneseq
    %v105 = vshrl.u32 %v104, 7
    %v106 = vsub.s32 0, %v105
    %v107 = vrot.slane %v102, %v106
    %v109 = vadd.f32 %v100, %v107
    %v110 = vadd.f32 %v101, %v107
    %v111 = vmul.f32 %v109, 0.5
    %v112 = vmul.f32 %v110, 0.5
    %v113 = vmul.f32 %v109, 0.044715
    %v114 = vmul.f32 %v110, 0.044715
    %v115 = vmul.f32 %v113, %v109
    %v116 = vmul.f32 %v114, %v110
    %v117 = vmul.f32 %v115, %v109
    %v118 = vmul.f32 %v116, %v110
    %v119 = vadd.f32 %v109, %v117
    %v120 = vadd.f32 %v110, %v118
    %v121 = vmul.f32 %v119, 0.7978846
    %v122 = vmul.f32 %v120, 0.7978846
    %v123 = vtanh.pop %v121
    %v124 = vtanh.pop %v122
    %v125 = vadd.f32 %v123, 1.0
    %v126 = vadd.f32 %v124, 1.0
    %v127 = vmul.f32 %v111, %v125
    %v128 = vmul.f32 %v112, %v126
    %v129 = vpack.c.bf16 %v128, %v127
    %v131 = vunpack.c.l.b16 %v129
    %v132 = vunpack.c.h.b16 %v129
    %v133 = vpack.c.b16 %v131, %v131
    %v134 = vpack.c.b16 %v132, %v132
    %vm137 = vcmask 519168
    %138 = vst.msk [vmem:[%s3] sm:$0xf] %vm137, %v133
    %139 = vst.msk [vmem:[%s3 + $0x4] sm:$0xf] %vm137, %v134
  $region21: #{transformer_xl_decoder_layer.13} parent=0 // pred_fallthru
    _
  // Predicated region
  $region22: #{transformer_xl_decoder_layer.13} parent=0 // pred_check
    _
  $region23: #{transformer_xl_decoder_layer.13} parent=0 // pred_check_branch
    %141 = sbr.rel (0) target = $region25
  $region24: #{transformer_xl_decoder_layer.13} parent=0 // pred_region
    _
  $region25: #{transformer_xl_decoder_layer.13} parent=0 // pred_fallthru
    _
  // Predicated region
  $region26: #{transformer_xl_decoder_layer.13} parent=0 // pred_check
    _
  $region27: #{transformer_xl_decoder_layer.13} parent=0 // pred_check_branch
    %143 = sbr.rel (0) target = $region29
  $region28: #{transformer_xl_decoder_layer.13} parent=0 // pred_region
    _
  $region29: #{transformer_xl_decoder_layer.13} parent=0 // pred_fallthru
    _

// kernel: transformer_xl_decoder_layer.12
$region0: #{transformer_xl_decoder_layer.12}
  #allocation0 [shape = 'u32[]', space=smem, size = 0x4, offset = 0x4, fixed_abs, tag = 'smem constant byte address 0x4 - core index']
  #allocation1 [shape = 'u32[144,128]{1,0:T(1,128)}', space=vmem, size = 0x12000, scoped, tag = 'internal scratch']
  %s0 = inlined_call_operand.vmem [shape: f32[16,32], index: 0, kind: input, shape index: {}]
  %s1 = inlined_call_operand.vmem [shape: bf16[16,32], index: 1, kind: input, shape index: {}]
  %s2 = inlined_call_operand.vmem [shape: f32[1,32], index: 2, kind: input, shape index: {}]
  %s3 = inlined_call_operand.vmem [shape: f32[1,32], index: 3, kind: input, shape index: {}]
  %s4 = inlined_call_operand.vmem [shape: f32[1,32], index: 4, kind: input, shape index: {}]
  %s5 = inlined_call_operand.vmem [shape: f32[1,32], index: 5, kind: input, shape index: {}]
  %s6 = inlined_call_operand.vmem [shape: bf16[16,32], index: 6, kind: output, shape index: {}]
  %s7 = sld [smem:[#allocation0]]
  $region34: #{transformer_xl_decoder_layer.12} parent=0
    _
  %s9 = ssub.s32 1, %s7
  %s10 = scalar_select 0, %s9, %s7
  // Predicated region
  $region2: #{transformer_xl_decoder_layer.12} parent=0 // pred_check
    _
  $region3: #{transformer_xl_decoder_layer.12} parent=0 // pred_check_branch
    %12 = sbr.rel (0) target = $region5
  $region4: #{transformer_xl_decoder_layer.12} parent=0 // pred_region
    _
  $region5: #{transformer_xl_decoder_layer.12} parent=0 // pred_fallthru
    _
  // Predicated region
  $region6: #{transformer_xl_decoder_layer.12} parent=0 // pred_check
    _
  $region7: #{transformer_xl_decoder_layer.12} parent=0 // pred_check_branch
    %14 = sbr.rel (0) target = $region9
  $region8: #{transformer_xl_decoder_layer.12} parent=0 // pred_region
    _
  $region9: #{transformer_xl_decoder_layer.12} parent=0 // pred_fallthru
    _
  // Predicated region
  $region10: #{transformer_xl_decoder_layer.12} parent=0 // pred_check
    _
  $region11: #{transformer_xl_decoder_layer.12} parent=0 // pred_check_branch
    %16 = sbr.rel (0) target = $region13
  $region12: #{transformer_xl_decoder_layer.12} parent=0 // pred_region
    _
  $region13: #{transformer_xl_decoder_layer.12} parent=0 // pred_fallthru
    _
  // Predicated region
  $region14: #{transformer_xl_decoder_layer.12} parent=0 // pred_check
    _
  $region15: #{transformer_xl_decoder_layer.12} parent=0 // pred_check_branch
    %18 = sbr.rel (0) target = $region17
  $region16: #{transformer_xl_decoder_layer.12} parent=0 // pred_region
    _
  $region17: #{transformer_xl_decoder_layer.12} parent=0 // pred_fallthru
    _
  // Predicated region
  $region18: #{transformer_xl_decoder_layer.12} parent=0 // pred_check
    _
  $region19: #{transformer_xl_decoder_layer.12} parent=0 // pred_check_branch
    %20 = sbr.rel (0) target = $region21
  $region20: #{transformer_xl_decoder_layer.12} parent=0 // pred_region
    _
  $region21: #{transformer_xl_decoder_layer.12} parent=0 // pred_fallthru
    _
  // Predicated region
  $region22: #{transformer_xl_decoder_layer.12} parent=0 // pred_check
    _
  $region23: #{transformer_xl_decoder_layer.12} parent=0 // pred_check_branch
    %22 = sbr.rel (0) target = $region25
  $region24: #{transformer_xl_decoder_layer.12} parent=0 // pred_region
    _
  $region25: #{transformer_xl_decoder_layer.12} parent=0 // pred_fallthru
    _
  %v23 = vld [vmem:[%s0] sm:$0xff]
  %v24 = vld [vmem:[%s0 + $0x8] sm:$0xff]
  %v25 = vld [vmem:[%s1] sm:$0xf]
  %v26 = vld [vmem:[%s1 + $0x4] sm:$0xf]
  %v27 = vunpack.c.l.bf16 %v25
  %v28 = vunpack.c.l.bf16 %v26
  %v29 = vadd.f32 %v23, %v27
  %v30 = vadd.f32 %v24, %v28
  %v31 = vld [vmem:[%s2] sm:$0x1]
  %v32 = vld [vmem:[%s3] sm:$0x1]
  %vm33 = vcmask 261120
  %v34 = vsel %vm33, %v29, 0.0
  %35 = vadd.xlane.f32.xlu0 %v34
  %v36 = vpop.xlane.xlu0 %35
  %v37 = vsel %vm33, %v30, 0.0
  %38 = vadd.xlane.f32.xlu0 %v37
  %v39 = vpop.xlane.xlu0 %38
  %v40 = vrcp.pop 32.0
  %v41 = vmul.f32 %v36, %v40
  %v42 = vmul.f32 %v39, %v40
  %v43 = vsub.f32 %v29, %v41
  %v44 = vsub.f32 %v30, %v42
  %v45 = vmul.f32 %v43, %v43
  %v46 = vmul.f32 %v44, %v44
  %v47 = vsel %vm33, %v45, 0.0
  %48 = vadd.xlane.f32.xlu0 %v47
  %v49 = vpop.xlane.xlu0 %48
  %v50 = vsel %vm33, %v46, 0.0
  %51 = vadd.xlane.f32.xlu0 %v50
  %v52 = vpop.xlane.xlu0 %51
  %v53 = vmul.f32 %v49, %v40
  %v54 = vmul.f32 %v52, %v40
  %v55 = vadd.f32 %v53, 1e-05
  %v56 = vadd.f32 %v54, 1e-05
  %v57 = vrsqrt.pop %v55
  %v58 = vrsqrt.pop %v56
  %v59 = vmul.f32 %v43, %v57
  %v60 = vmul.f32 %v44, %v58
  %v62 = vlaneseq
  %v63 = vshrl.u32 %v62, 7
  %v64 = vsub.s32 0, %v63
  %v65 = vrot.slane %v31, %v64
  %v67 = vmul.f32 %v59, %v65
  %v68 = vmul.f32 %v60, %v65
  %v70 = vlaneseq
  %v71 = vshrl.u32 %v70, 7
  %v72 = vsub.s32 0, %v71
  %v73 = vrot.slane %v32, %v72
  %v75 = vadd.f32 %v67, %v73
  %v76 = vadd.f32 %v68, %v73
  %v77 = vadd.f32 %v23, %v75
  %v78 = vadd.f32 %v24, %v76
  %v79 = vld [vmem:[%s4] sm:$0x1]
  %v80 = vld [vmem:[%s5] sm:$0x1]
  %v81 = vsel %vm33, %v77, 0.0
  %82 = vadd.xlane.f32.xlu0 %v81
  %v83 = vpop.xlane.xlu0 %82
  %v84 = vsel %vm33, %v78, 0.0
  %85 = vadd.xlane.f32.xlu0 %v84
  %v86 = vpop.xlane.xlu0 %85
  %v87 = vmul.f32 %v83, %v40
  %v88 = vmul.f32 %v86, %v40
  %v89 = vsub.f32 %v77, %v87
  %v90 = vsub.f32 %v78, %v88
  %v91 = vmul.f32 %v89, %v89
  %v92 = vmul.f32 %v90, %v90
  %v93 = vsel %vm33, %v91, 0.0
  %94 = vadd.xlane.f32.xlu0 %v93
  %v95 = vpop.xlane.xlu0 %94
  %v96 = vsel %vm33, %v92, 0.0
  %97 = vadd.xlane.f32.xlu0 %v96
  %v98 = vpop.xlane.xlu0 %97
  %v99 = vmul.f32 %v95, %v40
  %v100 = vmul.f32 %v98, %v40
  %v101 = vadd.f32 %v99, 1e-05
  %v102 = vadd.f32 %v100, 1e-05
  %v103 = vrsqrt.pop %v101
  %v104 = vrsqrt.pop %v102
  %v105 = vmul.f32 %v89, %v103
  %v106 = vmul.f32 %v90, %v104
  %v108 = vlaneseq
  %v109 = vshrl.u32 %v108, 7
  %v110 = vsub.s32 0, %v109
  %v111 = vrot.slane %v79, %v110
  %v113 = vmul.f32 %v105, %v111
  %v114 = vmul.f32 %v106, %v111
  %v116 = vlaneseq
  %v117 = vshrl.u32 %v116, 7
  %v118 = vsub.s32 0, %v117
  %v119 = vrot.slane %v80, %v118
  %v121 = vadd.f32 %v113, %v119
  %v122 = vadd.f32 %v114, %v119
  %v123 = vpack.c.bf16 %v122, %v121
  %v125 = vunpack.c.l.b16 %v123
  %v126 = vunpack.c.h.b16 %v123
  %v127 = vpack.c.b16 %v125, %v125
  %v128 = vpack.c.b16 %v126, %v126
  %vm131 = vcmask 257024
  %132 = vst.msk [vmem:[%s6] sm:$0xf] %vm131, %v127
  %133 = vst.msk [vmem:[%s6 + $0x4] sm:$0xf] %vm131, %v128
  // Predicated region
  $region26: #{transformer_xl_decoder_layer.12} parent=0 // pred_check
    _
  $region27: #{transformer_xl_decoder_layer.12} parent=0 // pred_check_branch
    %135 = sbr.rel (0) target = $region29
  $region28: #{transformer_xl_decoder_layer.12} parent=0 // pred_region
    _
  $region29: #{transformer_xl_decoder_layer.12} parent=0 // pred_fallthru
    _
  // Predicated region
  $region30: #{transformer_xl_decoder_layer.12} parent=0 // pred_check
    _
  $region31: #{transformer_xl_decoder_layer.12} parent=0 // pred_check_branch
    %137 = sbr.rel (0) target = $region33
  $region32: #{transformer_xl_decoder_layer.12} parent=0 // pred_region
    _
  $region33: #{transformer_xl_decoder_layer.12} parent=0 // pred_fallthru
    _

// kernel: transformer_xl_decoder_layer.15
$region0: #{transformer_xl_decoder_layer.15}
  #allocation0 [shape = 'u32[]', space=smem, size = 0x4, offset = 0x4, fixed_abs, tag = 'smem constant byte address 0x4 - core index']
  #allocation1 [shape = 'u32[144,128]{1,0:T(1,128)}', space=vmem, size = 0x12000, scoped, tag = 'internal scratch']
  %s0 = inlined_call_operand.vmem [shape: bf16[16,32], index: 0, kind: input, shape index: {}]
  %s1 = inlined_call_operand.vmem [shape: bf16[16,32], index: 1, kind: input, shape index: {}]
  %s2 = inlined_call_operand.vmem [shape: f32[1,32], index: 2, kind: input, shape index: {}]
  %s3 = inlined_call_operand.vmem [shape: f32[1,32], index: 3, kind: input, shape index: {}]
  %s4 = inlined_call_operand.vmem [shape: f32[16,32], index: 4, kind: output, shape index: {}]
  %s5 = sld [smem:[#allocation0]]
  $region26: #{transformer_xl_decoder_layer.15} parent=0
    _
  %s7 = ssub.s32 1, %s5
  %s8 = scalar_select 0, %s7, %s5
  // Predicated region
  $region2: #{transformer_xl_decoder_layer.15} parent=0 // pred_check
    _
  $region3: #{transformer_xl_decoder_layer.15} parent=0 // pred_check_branch
    %10 = sbr.rel (0) target = $region5
  $region4: #{transformer_xl_decoder_layer.15} parent=0 // pred_region
    _
  $region5: #{transformer_xl_decoder_layer.15} parent=0 // pred_fallthru
    _
  // Predicated region
  $region6: #{transformer_xl_decoder_layer.15} parent=0 // pred_check
    _
  $region7: #{transformer_xl_decoder_layer.15} parent=0 // pred_check_branch
    %12 = sbr.rel (0) target = $region9
  $region8: #{transformer_xl_decoder_layer.15} parent=0 // pred_region
    _
  $region9: #{transformer_xl_decoder_layer.15} parent=0 // pred_fallthru
    _
  // Predicated region
  $region10: #{transformer_xl_decoder_layer.15} parent=0 // pred_check
    _
  $region11: #{transformer_xl_decoder_layer.15} parent=0 // pred_check_branch
    %14 = sbr.rel (0) target = $region13
  $region12: #{transformer_xl_decoder_layer.15} parent=0 // pred_region
    _
  $region13: #{transformer_xl_decoder_layer.15} parent=0 // pred_fallthru
    _
  // Predicated region
  $region14: #{transformer_xl_decoder_layer.15} parent=0 // pred_check
    _
  $region15: #{transformer_xl_decoder_layer.15} parent=0 // pred_check_branch
    %16 = sbr.rel (0) target = $region17
  $region16: #{transformer_xl_decoder_layer.15} parent=0 // pred_region
    _
  $region17: #{transformer_xl_decoder_layer.15} parent=0 // pred_fallthru
    _
  %v17 = vld [vmem:[%s0] sm:$0xf]
  %v18 = vld [vmem:[%s0 + $0x4] sm:$0xf]
  %v19 = vunpack.c.l.bf16 %v17
  %v20 = vunpack.c.l.bf16 %v18
  %v21 = vld [vmem:[%s1] sm:$0xf]
  %v22 = vld [vmem:[%s1 + $0x4] sm:$0xf]
  %v23 = vunpack.c.l.bf16 %v21
  %v24 = vunpack.c.l.bf16 %v22
  %v25 = vadd.f32 %v19, %v23
  %v26 = vadd.f32 %v20, %v24
  %v27 = vld [vmem:[%s2] sm:$0x1]
  %v28 = vld [vmem:[%s3] sm:$0x1]
  %vm29 = vcmask 261120
  %v30 = vsel %vm29, %v25, 0.0
  %31 = vadd.xlane.f32.xlu0 %v30
  %v32 = vpop.xlane.xlu0 %31
  %v33 = vsel %vm29, %v26, 0.0
  %34 = vadd.xlane.f32.xlu0 %v33
  %v35 = vpop.xlane.xlu0 %34
  %v36 = vrcp.pop 32.0
  %v37 = vmul.f32 %v32, %v36
  %v38 = vmul.f32 %v35, %v36
  %v39 = vsub.f32 %v25, %v37
  %v40 = vsub.f32 %v26, %v38
  %v41 = vmul.f32 %v39, %v39
  %v42 = vmul.f32 %v40, %v40
  %v43 = vsel %vm29, %v41, 0.0
  %44 = vadd.xlane.f32.xlu0 %v43
  %v45 = vpop.xlane.xlu0 %44
  %v46 = vsel %vm29, %v42, 0.0
  %47 = vadd.xlane.f32.xlu0 %v46
  %v48 = vpop.xlane.xlu0 %47
  %v49 = vmul.f32 %v45, %v36
  %v50 = vmul.f32 %v48, %v36
  %v51 = vadd.f32 %v49, 1e-05
  %v52 = vadd.f32 %v50, 1e-05
  %v53 = vrsqrt.pop %v51
  %v54 = vrsqrt.pop %v52
  %v55 = vmul.f32 %v39, %v53
  %v56 = vmul.f32 %v40, %v54
  %v58 = vlaneseq
  %v59 = vshrl.u32 %v58, 7
  %v60 = vsub.s32 0, %v59
  %v61 = vrot.slane %v27, %v60
  %v63 = vmul.f32 %v55, %v61
  %v64 = vmul.f32 %v56, %v61
  %v66 = vlaneseq
  %v67 = vshrl.u32 %v66, 7
  %v68 = vsub.s32 0, %v67
  %v69 = vrot.slane %v28, %v68
  %v71 = vadd.f32 %v63, %v69
  %v72 = vadd.f32 %v64, %v69
  %73 = vst.msk [vmem:[%s4] sm:$0xff] %vm29, %v71
  %74 = vst.msk [vmem:[%s4 + $0x8] sm:$0xff] %vm29, %v72
  // Predicated region
  $region18: #{transformer_xl_decoder_layer.15} parent=0 // pred_check
    _
  $region19: #{transformer_xl_decoder_layer.15} parent=0 // pred_check_branch
    %76 = sbr.rel (0) target = $region21
  $region20: #{transformer_xl_decoder_layer.15} parent=0 // pred_region
    _
  $region21: #{transformer_xl_decoder_layer.15} parent=0 // pred_fallthru
    _
  // Predicated region
  $region22: #{transformer_xl_decoder_layer.15} parent=0 // pred_check
    _
  $region23: #{transformer_xl_decoder_layer.15} parent=0 // pred_check_branch
    %78 = sbr.rel (0) target = $region25
  $region24: #{transformer_xl_decoder_layer.15} parent=0 // pred_region
    _
  $region25: #{transformer_xl_decoder_layer.15} parent=0 // pred_fallthru
    _

// kernel: transformer_xl_decoder_layer.14
$region0: #{transformer_xl_decoder_layer.14}
  #allocation0 [shape = 'u32[]', space=smem, size = 0x4, offset = 0x4, fixed_abs, tag = 'smem constant byte address 0x4 - core index']
  #allocation1 [shape = 'u32[144,128]{1,0:T(1,128)}', space=vmem, size = 0x12000, scoped, tag = 'internal scratch']
  #allocation2 [shape = 'f32[16,32]{1,0:T(8,128)}', space=vmem, size = 0x2000, scoped, tag = 'scratch operand']
  %s0 = inlined_call_operand.vmem [shape: bf16[16,64], index: 0, kind: input, shape index: {}]
  %s1 = inlined_call_operand.vmem [shape: bf16[64,32], index: 1, kind: input, shape index: {}]
  %s2 = inlined_call_operand.vmem [shape: f32[1,32], index: 2, kind: input, shape index: {}]
  %s3 = inlined_call_operand.vmem [shape: bf16[16,32], index: 3, kind: output, shape index: {}]
  %s4 = sld [smem:[#allocation0]]
  $region30: #{transformer_xl_decoder_layer.14} parent=0
    _
  %s6 = ssub.s32 1, %s4
  %s7 = scalar_select 0, %s6, %s4
  // Predicated region
  $region2: #{transformer_xl_decoder_layer.14} parent=0 // pred_check
    _
  $region3: #{transformer_xl_decoder_layer.14} parent=0 // pred_check_branch
    %9 = sbr.rel (0) target = $region5
  $region4: #{transformer_xl_decoder_layer.14} parent=0 // pred_region
    _
  $region5: #{transformer_xl_decoder_layer.14} parent=0 // pred_fallthru
    _
  // Predicated region
  $region6: #{transformer_xl_decoder_layer.14} parent=0 // pred_check
    _
  $region7: #{transformer_xl_decoder_layer.14} parent=0 // pred_check_branch
    %11 = sbr.rel (0) target = $region9
  $region8: #{transformer_xl_decoder_layer.14} parent=0 // pred_region
    _
  $region9: #{transformer_xl_decoder_layer.14} parent=0 // pred_fallthru
    _
  // Predicated region
  $region10: #{transformer_xl_decoder_layer.14} parent=0 // pred_check
    _
  $region11: #{transformer_xl_decoder_layer.14} parent=0 // pred_check_branch
    %13 = sbr.rel (0) target = $region13
  $region12: #{transformer_xl_decoder_layer.14} parent=0 // pred_region
    _
  $region13: #{transformer_xl_decoder_layer.14} parent=0 // pred_fallthru
    _
  %p15 = scmp.eq.s32.totalorder 0, 0
  // Predicated region
  $region14: #{transformer_xl_decoder_layer.14} parent=0 // pred_check
    %p16 = pneg %p15
  $region15: #{transformer_xl_decoder_layer.14} parent=0 // pred_check_branch
    %18 = sbr.rel (%p16) target = $region17
  $region16: #{transformer_xl_decoder_layer.14} parent=0 // pred_region
    %vm19 = vcmask 261120
    %20 = vst.msk [vmem:[#allocation2] sm:$0xff] %vm19, 0.0
    %21 = vst.msk [vmem:[#allocation2 + $0x8] sm:$0xff] %vm19, 0.0
  $region17: #{transformer_xl_decoder_layer.14} parent=0 // pred_fallthru
    _
  %v22 = vld [vmem:[#allocation2] sm:$0xff]
  %v23 = vld [vmem:[#allocation2 + $0x8] sm:$0xff]
  %v24 = vld [vmem:[%s0] sm:$0xf]
  %v25 = vld [vmem:[%s0 + $0x4] sm:$0xf]
  %v26 = vld [vmem:[%s1] sm:$0xf]
  %v27 = vld [vmem:[%s1 + $0x4] sm:$0xf]
  %v28 = vld [vmem:[%s1 + $0x8] sm:$0xf]
  %v29 = vld [vmem:[%s1 + $0xc] sm:$0xf]
  %v30 = vld [vmem:[%s1 + $0x10] sm:$0xf]
  %v31 = vld [vmem:[%s1 + $0x14] sm:$0xf]
  %v32 = vld [vmem:[%s1 + $0x18] sm:$0xf]
  %v33 = vld [vmem:[%s1 + $0x1c] sm:$0xf]
  %v36 = vunpack.c.l.b16 %v24
  %v37 = vunpack.c.l.b16 %v25
  %v38 = vpack.c.b16 %v37, %v36
  %v47 = vunpack.c.l.b16 %v26
  %v48 = vunpack.c.l.b16 %v27
  %v49 = vunpack.c.l.b16 %v28
  %v50 = vunpack.c.l.b16 %v29
  %v51 = vunpack.c.l.b16 %v30
  %v52 = vunpack.c.l.b16 %v31
  %v53 = vunpack.c.l.b16 %v32
  %v54 = vunpack.c.l.b16 %v33
  %v55 = vpack.c.b16 %v48, %v47
  %v56 = vpack.c.b16 %v50, %v49
  %v57 = vpack.c.b16 %v52, %v51
  %v58 = vpack.c.b16 %v54, %v53
  %vm63 = vcmask 523264
  %v65 = vsel %vm63, %v38, 0
  %67 = vmatprep.subr.bf16.mxu0 0
  %68 = vmatpush1.bf16.msra.mxu0 %v55
  %69 = vmatprep.subr.bf16.mxu0 0
  %70 = vmatpush1.bf16.msra.mxu0 %v56
  %71 = vmatprep.subr.bf16.mxu0 0
  %72 = vmatpush1.bf16.msra.mxu0 %v57
  %73 = vmatprep.subr.bf16.mxu0 0
  %74 = vmatpush1.bf16.msra.mxu0 %v58
  %75 = vmatprep.subr.bf16.mxu0 0
  %76 = vmatpush1.bf16.msra.mxu0 0
  %77 = vmatprep.subr.bf16.mxu0 0
  %78 = vmatpush1.bf16.msra.mxu0 0
  %79 = vmatprep.subr.bf16.mxu0 0
  %80 = vmatpush1.bf16.msra.mxu0 0
  %81 = vmatprep.subr.bf16.mxu0 0
  %82 = vmatpush1.bf16.msra.mxu0 0
  %83 = vmatprep.subr.bf16.mxu0 0
  %84 = vmatpush1.bf16.msra.mxu0 0
  %85 = vmatprep.subr.bf16.mxu0 0
  %86 = vmatpush1.bf16.msra.mxu0 0
  %87 = vmatprep.subr.bf16.mxu0 0
  %88 = vmatpush1.bf16.msra.mxu0 0
  %89 = vmatprep.subr.bf16.mxu0 0
  %90 = vmatpush1.bf16.msra.mxu0 0
  %91 = vmatprep.subr.bf16.mxu0 0
  %92 = vmatpush1.bf16.msra.mxu0 0
  %93 = vmatprep.subr.bf16.mxu0 0
  %94 = vmatpush1.bf16.msra.mxu0 0
  %95 = vmatprep.subr.bf16.mxu0 0
  %96 = vmatpush1.bf16.msra.mxu0 0
  %97 = vmatprep.subr.bf16.mxu0 0
  %98 = vmatpush1.bf16.msra.mxu0 0
  %99 = vmatprep.mubr.bf16.mxu0 0
  %100 = vmatmul.mubr.bf16.gmra.mrb[0].mxu0 %v65
  %v101 = vpop.f32.mrb[0].mxu0
  %v102 = vadd.f32 0.0, %v101
  %v103 = vpop.f32.mrb[0].mxu0
  %v104 = vpop.f32.mrb[0].mxu0
  %v105 = vadd.f32 0.0, %v104
  %v106 = vpop.f32.mrb[0].mxu0
  %107 = vdwg.mxu0
  %v108 = vadd.f32 %v22, %v102
  %v109 = vadd.f32 %v23, %v105
  %vm110 = vcmask 261120
  %111 = vst.msk [vmem:[#allocation2] sm:$0xff] %vm110, %v108
  %112 = vst.msk [vmem:[#allocation2 + $0x8] sm:$0xff] %vm110, %v109
  // Predicated region
  $region18: #{transformer_xl_decoder_layer.14} parent=0 // pred_check
    %p113 = pneg %p15
  $region19: #{transformer_xl_decoder_layer.14} parent=0 // pred_check_branch
    %115 = sbr.rel (%p113) target = $region21
  $region20: #{transformer_xl_decoder_layer.14} parent=0 // pred_region
    %v116 = vld [vmem:[#allocation2] sm:$0xff]
    %v117 = vld [vmem:[#allocation2 + $0x8] sm:$0xff]
    %v118 = vld [vmem:[%s2] sm:$0x1]
    %v120 = vlaneseq
    %v121 = vshrl.u32 %v120, 7
    %v122 = vsub.s32 0, %v121
    %v123 = vrot.slane %v118, %v122
    %v125 = vadd.f32 %v116, %v123
    %v126 = vadd.f32 %v117, %v123
    %v127 = vpack.c.bf16 %v126, %v125
    %v129 = vunpack.c.l.b16 %v127
    %v130 = vunpack.c.h.b16 %v127
    %v131 = vpack.c.b16 %v129, %v129
    %v132 = vpack.c.b16 %v130, %v130
    %vm135 = vcmask 257024
    %136 = vst.msk [vmem:[%s3] sm:$0xf] %vm135, %v131
    %137 = vst.msk [vmem:[%s3 + $0x4] sm:$0xf] %vm135, %v132
  $region21: #{transformer_xl_decoder_layer.14} parent=0 // pred_fallthru
    _
  // Predicated region
  $region22: #{transformer_xl_decoder_layer.14} parent=0 // pred_check
    _
  $region23: #{transformer_xl_decoder_layer.14} parent=0 // pred_check_branch
    %139 = sbr.rel (0) target = $region25
  $region24: #{transformer_xl_decoder_layer.14} parent=0 // pred_region
    _
  $region25: #{transformer_xl_decoder_layer.14} parent=0 // pred_fallthru
    _
  // Predicated region
  $region26: #{transformer_xl_decoder_layer.14} parent=0 // pred_check
    _
  $region27: #{transformer_xl_decoder_layer.14} parent=0 // pred_check_branch
    %141 = sbr.rel (0) target = $region29
  $region28: #{transformer_xl_decoder_layer.14} parent=0 // pred_region
    _
  $region29: #{transformer_xl_decoder_layer.14} parent=0 // pred_fallthru
    _

</llo_original>
